<compile_context>
chip_gen: v5e
topology: v5e:2x2
jax: 0.10.0
libtpu: 0.0.40
codegen_flags: <defaults>
</compile_context>

<pallas_src>
import functools
import math

import jax
import jax.numpy as jnp
from jax.experimental import pallas as pl
from jax.experimental.pallas import tpu as pltpu


# ----------------------------- fused layer kernel ---------------------------

def _fused_layer_kernel(h_ref, pos_ref,
                        wqkv_ref, bqkv_ref, wo_ref, bo_ref,
                        ln1g_ref, ln1b_ref,
                        wff1_ref, bff1_ref, wff2_ref, bff2_ref,
                        ln2g_ref, ln2b_ref,
                        fing_ref, finb_ref,
                        o_ref,
                        *, nhead, add_pos, apply_final_ln, mxu_dtype):
    """One full transformer encoder layer for a single batch element.

    h_ref / o_ref blocks are (1, S, H); all weights are fully VMEM-resident.
    Residual adds + LayerNorm statistics are kept in f32 (VPU); matmul operands
    may be cast to `mxu_dtype` (bf16 recommended on v6e/v7x) with f32 MXU accum.
    """
    x = h_ref[0].astype(jnp.float32)                      # (S, H)
    S, H = x.shape
    Dh = H // nhead
    if add_pos:                                           # learned position encoding
        x = x + pos_ref[...].astype(jnp.float32)

    def ln(z, g_ref, b_ref):                              # eps=1e-5 as nn.LayerNorm
        mean = jnp.mean(z, axis=-1, keepdims=True)
        zc = z - mean
        var = jnp.mean(zc * zc, axis=-1, keepdims=True)
        y = zc * jax.lax.rsqrt(var + 1e-5)
        return y * g_ref[...].astype(jnp.float32) + b_ref[...].astype(jnp.float32)

    def mm(a, w_ref, b_ref):                              # MXU matmul + bias epilogue
        acc = jnp.dot(a.astype(mxu_dtype), w_ref[...].astype(mxu_dtype),
                      preferred_element_type=jnp.float32)
        return acc + b_ref[...].astype(jnp.float32)

    # ---- causal multi-head self attention --------------------------------
    qkv = mm(x, wqkv_ref, bqkv_ref)                       # (S, 3H) f32
    scale = 1.0 / math.sqrt(Dh)
    # causal mask built once, shared by every head (diagonal stays unmasked)
    row = jax.lax.broadcasted_iota(jnp.int32, (S, S), 0)
    col = jax.lax.broadcasted_iota(jnp.int32, (S, S), 1)
    causal = col <= row

    head_outs = []
    for hd in range(nhead):                               # static unroll over heads
        qh = qkv[:, hd * Dh:(hd + 1) * Dh]                # (S, Dh) static lane slices
        kh = qkv[:, H + hd * Dh:H + (hd + 1) * Dh]
        vh = qkv[:, 2 * H + hd * Dh:2 * H + (hd + 1) * Dh]
        s = jnp.dot(qh.astype(mxu_dtype), kh.astype(mxu_dtype).T,
                    preferred_element_type=jnp.float32) * scale
        s = jnp.where(causal, s, -1e30)
        m = jnp.max(s, axis=-1, keepdims=True)
        p = jnp.exp(s - m)
        denom = jnp.sum(p, axis=-1, keepdims=True)
        o = jnp.dot(p.astype(mxu_dtype), vh.astype(mxu_dtype),
                    preferred_element_type=jnp.float32)
        o = o * pl.reciprocal(denom, approx=True)         # EUP slot, frees VALU
        head_outs.append(o)
    attn = jnp.concatenate(head_outs, axis=-1)            # (S, H) lane-dense

    # output projection + residual + LayerNorm (fused epilogue)
    h1 = ln(x + mm(attn, wo_ref, bo_ref), ln1g_ref, ln1b_ref)

    # ---- feed-forward + residual + LayerNorm (fused) ----------------------
    ff = jnp.maximum(mm(h1, wff1_ref, bff1_ref), 0.0)     # ReLU
    h2 = ln(h1 + mm(ff, wff2_ref, bff2_ref), ln2g_ref, ln2b_ref)

    if apply_final_ln:                                    # CausalBlock.layer_norm
        h2 = ln(h2, fing_ref, finb_ref)

    o_ref[0] = h2.astype(o_ref.dtype)


def fused_layer(h, pos, lp, final_g, final_b, *, nhead, add_pos,
                apply_final_ln, mxu_dtype=jnp.float32):
    """h: (B, S, H) -> (B, S, H); one pallas_call for the whole layer."""
    B, S, H = h.shape
    F = lp["w_ff1"].shape[1]
    kernel = functools.partial(_fused_layer_kernel, nhead=nhead, add_pos=add_pos,
                               apply_final_ln=apply_final_ln, mxu_dtype=mxu_dtype)
    row = lambda b: (0, 0)                                # weights resident across grid
    return pl.pallas_call(
        kernel,
        out_shape=jax.ShapeDtypeStruct((B, S, H), h.dtype),
        grid=(B,),
        in_specs=[
            pl.BlockSpec((1, S, H), lambda b: (b, 0, 0)),     # activations
            pl.BlockSpec((S, H), row),                        # position encoding
            pl.BlockSpec((H, 3 * H), row),                    # w_qkv
            pl.BlockSpec((1, 3 * H), row),                    # b_qkv
            pl.BlockSpec((H, H), row),                        # w_o
            pl.BlockSpec((1, H), row),                        # b_o
            pl.BlockSpec((1, H), row),                        # ln1_g
            pl.BlockSpec((1, H), row),                        # ln1_b
            pl.BlockSpec((H, F), row),                        # w_ff1
            pl.BlockSpec((1, F), row),                        # b_ff1
            pl.BlockSpec((F, H), row),                        # w_ff2
            pl.BlockSpec((1, H), row),                        # b_ff2
            pl.BlockSpec((1, H), row),                        # ln2_g
            pl.BlockSpec((1, H), row),                        # ln2_b
            pl.BlockSpec((1, H), row),                        # final ln_g
            pl.BlockSpec((1, H), row),                        # final ln_b
        ],
        out_specs=pl.BlockSpec((1, S, H), lambda b: (b, 0, 0)),
        compiler_params=pltpu.CompilerParams(
            dimension_semantics=("parallel",)),               # v7x: split over 2 TCs
    )(h, pos,
      lp["w_qkv"], lp["b_qkv"].reshape(1, -1),
      lp["w_o"], lp["b_o"].reshape(1, -1),
      lp["ln1_g"].reshape(1, -1), lp["ln1_b"].reshape(1, -1),
      lp["w_ff1"], lp["b_ff1"].reshape(1, -1),
      lp["w_ff2"], lp["b_ff2"].reshape(1, -1),
      lp["ln2_g"].reshape(1, -1), lp["ln2_b"].reshape(1, -1),
      final_g.reshape(1, -1), final_b.reshape(1, -1))


# --------------------------- parameter construction -------------------------

def init_params(key, num_layers, hidden, nhead, inner_hidden, pos_enc_size):
    def dense(k, fan_in, fan_out):
        kw, _ = jax.random.split(k)
        w = jax.random.normal(kw, (fan_in, fan_out), jnp.float32) * 0.02
        b = jnp.zeros((fan_out,), jnp.float32)
        return w, b

    keys = jax.random.split(key, num_layers + 1)
    params = {"pos": jax.random.normal(keys[0], (pos_enc_size, hidden),
                                       jnp.float32) * 0.02}
    layers = []
    for li in range(num_layers):
        lk = jax.random.split(keys[li + 1], 4)
        w_qkv, b_qkv = dense(lk[0], hidden, 3 * hidden)
        w_o, b_o = dense(lk[1], hidden, hidden)
        w1, b1 = dense(lk[2], hidden, inner_hidden)
        w2, b2 = dense(lk[3], inner_hidden, hidden)
        layers.append({
            "w_qkv": w_qkv, "b_qkv": b_qkv,
            "w_o": w_o, "b_o": b_o,
            "w_ff1": w1, "b_ff1": b1,
            "w_ff2": w2, "b_ff2": b2,
            "ln1_g": jnp.ones((hidden,), jnp.float32),
            "ln1_b": jnp.zeros((hidden,), jnp.float32),
            "ln2_g": jnp.ones((hidden,), jnp.float32),
            "ln2_b": jnp.zeros((hidden,), jnp.float32),
        })
    params["layers"] = layers
    params["final_ln_g"] = jnp.ones((hidden,), jnp.float32)
    params["final_ln_b"] = jnp.zeros((hidden,), jnp.float32)
    return params


# ------------------------------ forward pass --------------------------------

def causal_block_forward(params, x, nhead, mxu_dtype=jnp.float32):
    """x: (B, S, H). Returns (layer_norm(out), cache) like CausalBlock.forward."""
    B, S, H = x.shape
    assert S <= params["pos"].shape[0], "sequence longer than position_encoding_size"
    pos = params["pos"][:S]                                 # (S, H)
    layers = params["layers"]
    h = x
    for li, lp in enumerate(layers):
        h = fused_layer(h, pos, lp,
                        params["final_ln_g"], params["final_ln_b"],
                        nhead=nhead,
                        add_pos=(li == 0),
                        apply_final_ln=(li == len(layers) - 1),
                        mxu_dtype=mxu_dtype)
    cache = None   # no BlockRecurrentWrapper -> no recurrent cache
    return h, cache


# ---------------------------------- main -------------------------------------

if __name__ == "__main__":
    # small config consistent with the module
    num_layers = 2
    hidden_size = 32
    nhead = 2
    inner_hidden_size = 64
    position_encoding_size = 64
    B, S = 2, 16

    key = jax.random.PRNGKey(0)
    kx, kp = jax.random.split(key)
    x = jax.random.normal(kx, (B, S, hidden_size), jnp.float32)
    params = init_params(kp, num_layers, hidden_size, nhead,
                         inner_hidden_size, position_encoding_size)

    # mxu_dtype=jnp.bfloat16 is recommended on v6e/v7x for real sizes; f32 here
    # keeps the tiny test exact.
    fwd = jax.jit(lambda p, xx: causal_block_forward(p, xx, nhead=nhead,
                                                     mxu_dtype=jnp.float32))
    out, cache = fwd(params, x)
    out = jax.block_until_ready(out)
    assert out.shape == (B, S, hidden_size)
    assert jnp.all(jnp.isfinite(out))
    print("KERNEL_OK")
</pallas_src>

<mosaic_0001>
module attributes {stable_mosaic.version = 11 : i64} {
  func.func @_fused_layer_kernel(%arg0: i32, %arg1: memref<1x16x32xf32, #tpu.memory_space<vmem>>, %arg2: memref<16x32xf32, #tpu.memory_space<vmem>>, %arg3: memref<32x96xf32, #tpu.memory_space<vmem>>, %arg4: memref<1x96xf32, #tpu.memory_space<vmem>>, %arg5: memref<32x32xf32, #tpu.memory_space<vmem>>, %arg6: memref<1x32xf32, #tpu.memory_space<vmem>>, %arg7: memref<1x32xf32, #tpu.memory_space<vmem>>, %arg8: memref<1x32xf32, #tpu.memory_space<vmem>>, %arg9: memref<32x64xf32, #tpu.memory_space<vmem>>, %arg10: memref<1x64xf32, #tpu.memory_space<vmem>>, %arg11: memref<64x32xf32, #tpu.memory_space<vmem>>, %arg12: memref<1x32xf32, #tpu.memory_space<vmem>>, %arg13: memref<1x32xf32, #tpu.memory_space<vmem>>, %arg14: memref<1x32xf32, #tpu.memory_space<vmem>>, %arg15: memref<1x32xf32, #tpu.memory_space<vmem>>, %arg16: memref<1x32xf32, #tpu.memory_space<vmem>>, %arg17: memref<1x16x32xf32, #tpu.memory_space<vmem>>) attributes {dimension_semantics = [#tpu.dimension_semantics<parallel>], iteration_bounds = array<i64: 2>, scalar_prefetch = 0 : i64, scratch_operands = 0 : i64, tpu.core_type = #tpu.core_type<tc>, window_params = [{transform_indices = @transform_0, window_bounds = array<i64: 1, 16, 32>}, {pipeline_mode = #tpu.pipeline_mode<synchronous>, transform_indices = @transform_1, window_bounds = array<i64: 16, 32>}, {pipeline_mode = #tpu.pipeline_mode<synchronous>, transform_indices = @transform_2, window_bounds = array<i64: 32, 96>}, {pipeline_mode = #tpu.pipeline_mode<synchronous>, transform_indices = @transform_3, window_bounds = array<i64: 1, 96>}, {pipeline_mode = #tpu.pipeline_mode<synchronous>, transform_indices = @transform_4, window_bounds = array<i64: 32, 32>}, {pipeline_mode = #tpu.pipeline_mode<synchronous>, transform_indices = @transform_5, window_bounds = array<i64: 1, 32>}, {pipeline_mode = #tpu.pipeline_mode<synchronous>, transform_indices = @transform_6, window_bounds = array<i64: 1, 32>}, {pipeline_mode = #tpu.pipeline_mode<synchronous>, transform_indices = @transform_7, window_bounds = array<i64: 1, 32>}, {pipeline_mode = #tpu.pipeline_mode<synchronous>, transform_indices = @transform_8, window_bounds = array<i64: 32, 64>}, {pipeline_mode = #tpu.pipeline_mode<synchronous>, transform_indices = @transform_9, window_bounds = array<i64: 1, 64>}, {pipeline_mode = #tpu.pipeline_mode<synchronous>, transform_indices = @transform_10, window_bounds = array<i64: 64, 32>}, {pipeline_mode = #tpu.pipeline_mode<synchronous>, transform_indices = @transform_11, window_bounds = array<i64: 1, 32>}, {pipeline_mode = #tpu.pipeline_mode<synchronous>, transform_indices = @transform_12, window_bounds = array<i64: 1, 32>}, {pipeline_mode = #tpu.pipeline_mode<synchronous>, transform_indices = @transform_13, window_bounds = array<i64: 1, 32>}, {pipeline_mode = #tpu.pipeline_mode<synchronous>, transform_indices = @transform_14, window_bounds = array<i64: 1, 32>}, {pipeline_mode = #tpu.pipeline_mode<synchronous>, transform_indices = @transform_15, window_bounds = array<i64: 1, 32>}, {transform_indices = @transform_16, window_bounds = array<i64: 1, 16, 32>}]} {
    %c0 = arith.constant 0 : index
    %c0_0 = arith.constant 0 : index
    %c0_1 = arith.constant 0 : index
    %0 = vector.load %arg1[%c0, %c0_0, %c0_1] : memref<1x16x32xf32, #tpu.memory_space<vmem>>, vector<1x16x32xf32>
    %1 = vector.shape_cast %0 : vector<1x16x32xf32> to vector<16x32xf32>
    %c0_2 = arith.constant 0 : index
    %c0_3 = arith.constant 0 : index
    %2 = vector.load %arg3[%c0_2, %c0_3] : memref<32x96xf32, #tpu.memory_space<vmem>>, vector<32x96xf32>
    %cst = arith.constant dense<0.000000e+00> : vector<16x96xf32>
    %3 = tpu.matmul %1, %2, %cst {dimension_numbers = #tpu.dot_dimension_numbers<[1], [0], [0], [1], [0, 0, 1, 1], [], []>} : vector<16x32xf32>, vector<32x96xf32>, vector<16x96xf32> -> vector<16x96xf32>
    %c0_4 = arith.constant 0 : index
    %c0_5 = arith.constant 0 : index
    %4 = vector.load %arg4[%c0_4, %c0_5] : memref<1x96xf32, #tpu.memory_space<vmem>>, vector<1x96xf32>
    %5 = vector.broadcast %4 : vector<1x96xf32> to vector<16x96xf32>
    %6 = arith.addf %3, %5 : vector<16x96xf32>
    %7 = tpu.iota {dimensions = array<i32: 0>} : vector<16x16xi32>
    %8 = tpu.iota {dimensions = array<i32: 1>} : vector<16x16xi32>
    %9 = arith.cmpi sle, %8, %7 : vector<16x16xi32>
    %10 = vector.extract_strided_slice %6 {offsets = [0, 0], sizes = [16, 16], strides = [1, 1]} : vector<16x96xf32> to vector<16x16xf32>
    %11 = vector.extract_strided_slice %6 {offsets = [0, 32], sizes = [16, 16], strides = [1, 1]} : vector<16x96xf32> to vector<16x16xf32>
    %12 = vector.extract_strided_slice %6 {offsets = [0, 64], sizes = [16, 16], strides = [1, 1]} : vector<16x96xf32> to vector<16x16xf32>
    %13 = tpu.transpose %11, [1, 0] : vector<16x16xf32> -> vector<16x16xf32>
    %cst_6 = arith.constant dense<0.000000e+00> : vector<16x16xf32>
    %14 = tpu.matmul %10, %13, %cst_6 {dimension_numbers = #tpu.dot_dimension_numbers<[1], [0], [0], [1], [0, 0, 1, 1], [], []>} : vector<16x16xf32>, vector<16x16xf32>, vector<16x16xf32> -> vector<16x16xf32>
    %cst_7 = arith.constant 2.500000e-01 : f32
    %15 = vector.broadcast %cst_7 : f32 to vector<16x16xf32>
    %16 = arith.mulf %14, %15 : vector<16x16xf32>
    %cst_8 = arith.constant -1.000000e+30 : f32
    %17 = vector.broadcast %cst_8 : f32 to vector<16x16xf32>
    %18 = arith.select %9, %16, %17 : vector<16x16xi1>, vector<16x16xf32>
    %cst_9 = arith.constant dense<0xFF800000> : vector<16xf32>
    %19 = vector.multi_reduction <maximumf>, %18, %cst_9 [1] : vector<16x16xf32> to vector<16xf32>
    %20 = vector.shape_cast %19 : vector<16xf32> to vector<16x1xf32>
    %21 = vector.broadcast %20 : vector<16x1xf32> to vector<16x16xf32>
    %22 = arith.subf %18, %21 : vector<16x16xf32>
    %23 = math.exp %22 : vector<16x16xf32>
    %cst_10 = arith.constant dense<0.000000e+00> : vector<16xf32>
    %24 = vector.multi_reduction <add>, %23, %cst_10 [1] : vector<16x16xf32> to vector<16xf32>
    %25 = vector.shape_cast %24 : vector<16xf32> to vector<16x1xf32>
    %cst_11 = arith.constant dense<0.000000e+00> : vector<16x16xf32>
    %26 = tpu.matmul %23, %12, %cst_11 {dimension_numbers = #tpu.dot_dimension_numbers<[1], [0], [0], [1], [0, 0, 1, 1], [], []>} : vector<16x16xf32>, vector<16x16xf32>, vector<16x16xf32> -> vector<16x16xf32>
    %27 = tpu.reciprocal %25 {approx = true} : vector<16x1xf32> -> vector<16x1xf32>
    %28 = vector.broadcast %27 : vector<16x1xf32> to vector<16x16xf32>
    %29 = arith.mulf %26, %28 : vector<16x16xf32>
    %30 = vector.extract_strided_slice %6 {offsets = [0, 16], sizes = [16, 16], strides = [1, 1]} : vector<16x96xf32> to vector<16x16xf32>
    %31 = vector.extract_strided_slice %6 {offsets = [0, 48], sizes = [16, 16], strides = [1, 1]} : vector<16x96xf32> to vector<16x16xf32>
    %32 = vector.extract_strided_slice %6 {offsets = [0, 80], sizes = [16, 16], strides = [1, 1]} : vector<16x96xf32> to vector<16x16xf32>
    %33 = tpu.transpose %31, [1, 0] : vector<16x16xf32> -> vector<16x16xf32>
    %cst_12 = arith.constant dense<0.000000e+00> : vector<16x16xf32>
    %34 = tpu.matmul %30, %33, %cst_12 {dimension_numbers = #tpu.dot_dimension_numbers<[1], [0], [0], [1], [0, 0, 1, 1], [], []>} : vector<16x16xf32>, vector<16x16xf32>, vector<16x16xf32> -> vector<16x16xf32>
    %cst_13 = arith.constant 2.500000e-01 : f32
    %35 = vector.broadcast %cst_13 : f32 to vector<16x16xf32>
    %36 = arith.mulf %34, %35 : vector<16x16xf32>
    %cst_14 = arith.constant -1.000000e+30 : f32
    %37 = vector.broadcast %cst_14 : f32 to vector<16x16xf32>
    %38 = arith.select %9, %36, %37 : vector<16x16xi1>, vector<16x16xf32>
    %cst_15 = arith.constant dense<0xFF800000> : vector<16xf32>
    %39 = vector.multi_reduction <maximumf>, %38, %cst_15 [1] : vector<16x16xf32> to vector<16xf32>
    %40 = vector.shape_cast %39 : vector<16xf32> to vector<16x1xf32>
    %41 = vector.broadcast %40 : vector<16x1xf32> to vector<16x16xf32>
    %42 = arith.subf %38, %41 : vector<16x16xf32>
    %43 = math.exp %42 : vector<16x16xf32>
    %cst_16 = arith.constant dense<0.000000e+00> : vector<16xf32>
    %44 = vector.multi_reduction <add>, %43, %cst_16 [1] : vector<16x16xf32> to vector<16xf32>
    %45 = vector.shape_cast %44 : vector<16xf32> to vector<16x1xf32>
    %cst_17 = arith.constant dense<0.000000e+00> : vector<16x16xf32>
    %46 = tpu.matmul %43, %32, %cst_17 {dimension_numbers = #tpu.dot_dimension_numbers<[1], [0], [0], [1], [0, 0, 1, 1], [], []>} : vector<16x16xf32>, vector<16x16xf32>, vector<16x16xf32> -> vector<16x16xf32>
    %47 = tpu.reciprocal %45 {approx = true} : vector<16x1xf32> -> vector<16x1xf32>
    %48 = vector.broadcast %47 : vector<16x1xf32> to vector<16x16xf32>
    %49 = arith.mulf %46, %48 : vector<16x16xf32>
    %50 = tpu.concatenate %29, %49 in 1 : vector<16x16xf32>, vector<16x16xf32> -> vector<16x32xf32>
    %c0_18 = arith.constant 0 : index
    %c0_19 = arith.constant 0 : index
    %51 = vector.load %arg5[%c0_18, %c0_19] : memref<32x32xf32, #tpu.memory_space<vmem>>, vector<32x32xf32>
    %cst_20 = arith.constant dense<0.000000e+00> : vector<16x32xf32>
    %52 = tpu.matmul %50, %51, %cst_20 {dimension_numbers = #tpu.dot_dimension_numbers<[1], [0], [0], [1], [0, 0, 1, 1], [], []>} : vector<16x32xf32>, vector<32x32xf32>, vector<16x32xf32> -> vector<16x32xf32>
    %c0_21 = arith.constant 0 : index
    %c0_22 = arith.constant 0 : index
    %53 = vector.load %arg6[%c0_21, %c0_22] : memref<1x32xf32, #tpu.memory_space<vmem>>, vector<1x32xf32>
    %54 = vector.broadcast %53 : vector<1x32xf32> to vector<16x32xf32>
    %55 = arith.addf %52, %54 : vector<16x32xf32>
    %56 = arith.addf %1, %55 : vector<16x32xf32>
    %cst_23 = arith.constant dense<0.000000e+00> : vector<16xf32>
    %57 = vector.multi_reduction <add>, %56, %cst_23 [1] : vector<16x32xf32> to vector<16xf32>
    %58 = vector.shape_cast %57 : vector<16xf32> to vector<16x1xf32>
    %cst_24 = arith.constant 3.200000e+01 : f32
    %59 = vector.broadcast %cst_24 : f32 to vector<16x1xf32>
    %60 = arith.divf %58, %59 : vector<16x1xf32>
    %61 = vector.broadcast %60 : vector<16x1xf32> to vector<16x32xf32>
    %62 = arith.subf %56, %61 : vector<16x32xf32>
    %63 = arith.mulf %62, %62 : vector<16x32xf32>
    %cst_25 = arith.constant dense<0.000000e+00> : vector<16xf32>
    %64 = vector.multi_reduction <add>, %63, %cst_25 [1] : vector<16x32xf32> to vector<16xf32>
    %65 = vector.shape_cast %64 : vector<16xf32> to vector<16x1xf32>
    %cst_26 = arith.constant 3.200000e+01 : f32
    %66 = vector.broadcast %cst_26 : f32 to vector<16x1xf32>
    %67 = arith.divf %65, %66 : vector<16x1xf32>
    %cst_27 = arith.constant 9.99999974E-6 : f32
    %68 = vector.broadcast %cst_27 : f32 to vector<16x1xf32>
    %69 = arith.addf %67, %68 : vector<16x1xf32>
    %70 = math.rsqrt %69 : vector<16x1xf32>
    %71 = vector.broadcast %70 : vector<16x1xf32> to vector<16x32xf32>
    %72 = arith.mulf %62, %71 : vector<16x32xf32>
    %c0_28 = arith.constant 0 : index
    %c0_29 = arith.constant 0 : index
    %73 = vector.load %arg7[%c0_28, %c0_29] : memref<1x32xf32, #tpu.memory_space<vmem>>, vector<1x32xf32>
    %74 = vector.broadcast %73 : vector<1x32xf32> to vector<16x32xf32>
    %75 = arith.mulf %72, %74 : vector<16x32xf32>
    %c0_30 = arith.constant 0 : index
    %c0_31 = arith.constant 0 : index
    %76 = vector.load %arg8[%c0_30, %c0_31] : memref<1x32xf32, #tpu.memory_space<vmem>>, vector<1x32xf32>
    %77 = vector.broadcast %76 : vector<1x32xf32> to vector<16x32xf32>
    %78 = arith.addf %75, %77 : vector<16x32xf32>
    %c0_32 = arith.constant 0 : index
    %c0_33 = arith.constant 0 : index
    %79 = vector.load %arg9[%c0_32, %c0_33] : memref<32x64xf32, #tpu.memory_space<vmem>>, vector<32x64xf32>
    %cst_34 = arith.constant dense<0.000000e+00> : vector<16x64xf32>
    %80 = tpu.matmul %78, %79, %cst_34 {dimension_numbers = #tpu.dot_dimension_numbers<[1], [0], [0], [1], [0, 0, 1, 1], [], []>} : vector<16x32xf32>, vector<32x64xf32>, vector<16x64xf32> -> vector<16x64xf32>
    %c0_35 = arith.constant 0 : index
    %c0_36 = arith.constant 0 : index
    %81 = vector.load %arg10[%c0_35, %c0_36] : memref<1x64xf32, #tpu.memory_space<vmem>>, vector<1x64xf32>
    %82 = vector.broadcast %81 : vector<1x64xf32> to vector<16x64xf32>
    %83 = arith.addf %80, %82 : vector<16x64xf32>
    %cst_37 = arith.constant 0.000000e+00 : f32
    %84 = vector.broadcast %cst_37 : f32 to vector<16x64xf32>
    %85 = arith.maximumf %83, %84 : vector<16x64xf32>
    %c0_38 = arith.constant 0 : index
    %c0_39 = arith.constant 0 : index
    %86 = vector.load %arg11[%c0_38, %c0_39] : memref<64x32xf32, #tpu.memory_space<vmem>>, vector<64x32xf32>
    %cst_40 = arith.constant dense<0.000000e+00> : vector<16x32xf32>
    %87 = tpu.matmul %85, %86, %cst_40 {dimension_numbers = #tpu.dot_dimension_numbers<[1], [0], [0], [1], [0, 0, 1, 1], [], []>} : vector<16x64xf32>, vector<64x32xf32>, vector<16x32xf32> -> vector<16x32xf32>
    %c0_41 = arith.constant 0 : index
    %c0_42 = arith.constant 0 : index
    %88 = vector.load %arg12[%c0_41, %c0_42] : memref<1x32xf32, #tpu.memory_space<vmem>>, vector<1x32xf32>
    %89 = vector.broadcast %88 : vector<1x32xf32> to vector<16x32xf32>
    %90 = arith.addf %87, %89 : vector<16x32xf32>
    %91 = arith.addf %78, %90 : vector<16x32xf32>
    %cst_43 = arith.constant dense<0.000000e+00> : vector<16xf32>
    %92 = vector.multi_reduction <add>, %91, %cst_43 [1] : vector<16x32xf32> to vector<16xf32>
    %93 = vector.shape_cast %92 : vector<16xf32> to vector<16x1xf32>
    %cst_44 = arith.constant 3.200000e+01 : f32
    %94 = vector.broadcast %cst_44 : f32 to vector<16x1xf32>
    %95 = arith.divf %93, %94 : vector<16x1xf32>
    %96 = vector.broadcast %95 : vector<16x1xf32> to vector<16x32xf32>
    %97 = arith.subf %91, %96 : vector<16x32xf32>
    %98 = arith.mulf %97, %97 : vector<16x32xf32>
    %cst_45 = arith.constant dense<0.000000e+00> : vector<16xf32>
    %99 = vector.multi_reduction <add>, %98, %cst_45 [1] : vector<16x32xf32> to vector<16xf32>
    %100 = vector.shape_cast %99 : vector<16xf32> to vector<16x1xf32>
    %cst_46 = arith.constant 3.200000e+01 : f32
    %101 = vector.broadcast %cst_46 : f32 to vector<16x1xf32>
    %102 = arith.divf %100, %101 : vector<16x1xf32>
    %cst_47 = arith.constant 9.99999974E-6 : f32
    %103 = vector.broadcast %cst_47 : f32 to vector<16x1xf32>
    %104 = arith.addf %102, %103 : vector<16x1xf32>
    %105 = math.rsqrt %104 : vector<16x1xf32>
    %106 = vector.broadcast %105 : vector<16x1xf32> to vector<16x32xf32>
    %107 = arith.mulf %97, %106 : vector<16x32xf32>
    %c0_48 = arith.constant 0 : index
    %c0_49 = arith.constant 0 : index
    %108 = vector.load %arg13[%c0_48, %c0_49] : memref<1x32xf32, #tpu.memory_space<vmem>>, vector<1x32xf32>
    %109 = vector.broadcast %108 : vector<1x32xf32> to vector<16x32xf32>
    %110 = arith.mulf %107, %109 : vector<16x32xf32>
    %c0_50 = arith.constant 0 : index
    %c0_51 = arith.constant 0 : index
    %111 = vector.load %arg14[%c0_50, %c0_51] : memref<1x32xf32, #tpu.memory_space<vmem>>, vector<1x32xf32>
    %112 = vector.broadcast %111 : vector<1x32xf32> to vector<16x32xf32>
    %113 = arith.addf %110, %112 : vector<16x32xf32>
    %cst_52 = arith.constant dense<0.000000e+00> : vector<16xf32>
    %114 = vector.multi_reduction <add>, %113, %cst_52 [1] : vector<16x32xf32> to vector<16xf32>
    %115 = vector.shape_cast %114 : vector<16xf32> to vector<16x1xf32>
    %cst_53 = arith.constant 3.200000e+01 : f32
    %116 = vector.broadcast %cst_53 : f32 to vector<16x1xf32>
    %117 = arith.divf %115, %116 : vector<16x1xf32>
    %118 = vector.broadcast %117 : vector<16x1xf32> to vector<16x32xf32>
    %119 = arith.subf %113, %118 : vector<16x32xf32>
    %120 = arith.mulf %119, %119 : vector<16x32xf32>
    %cst_54 = arith.constant dense<0.000000e+00> : vector<16xf32>
    %121 = vector.multi_reduction <add>, %120, %cst_54 [1] : vector<16x32xf32> to vector<16xf32>
    %122 = vector.shape_cast %121 : vector<16xf32> to vector<16x1xf32>
    %cst_55 = arith.constant 3.200000e+01 : f32
    %123 = vector.broadcast %cst_55 : f32 to vector<16x1xf32>
    %124 = arith.divf %122, %123 : vector<16x1xf32>
    %cst_56 = arith.constant 9.99999974E-6 : f32
    %125 = vector.broadcast %cst_56 : f32 to vector<16x1xf32>
    %126 = arith.addf %124, %125 : vector<16x1xf32>
    %127 = math.rsqrt %126 : vector<16x1xf32>
    %128 = vector.broadcast %127 : vector<16x1xf32> to vector<16x32xf32>
    %129 = arith.mulf %119, %128 : vector<16x32xf32>
    %c0_57 = arith.constant 0 : index
    %c0_58 = arith.constant 0 : index
    %130 = vector.load %arg15[%c0_57, %c0_58] : memref<1x32xf32, #tpu.memory_space<vmem>>, vector<1x32xf32>
    %131 = vector.broadcast %130 : vector<1x32xf32> to vector<16x32xf32>
    %132 = arith.mulf %129, %131 : vector<16x32xf32>
    %c0_59 = arith.constant 0 : index
    %c0_60 = arith.constant 0 : index
    %133 = vector.load %arg16[%c0_59, %c0_60] : memref<1x32xf32, #tpu.memory_space<vmem>>, vector<1x32xf32>
    %134 = vector.broadcast %133 : vector<1x32xf32> to vector<16x32xf32>
    %135 = arith.addf %132, %134 : vector<16x32xf32>
    %c0_61 = arith.constant 0 : index
    %c0_62 = arith.constant 0 : index
    %c0_63 = arith.constant 0 : index
    %136 = vector.load %arg17[%c0_61, %c0_62, %c0_63] : memref<1x16x32xf32, #tpu.memory_space<vmem>>, vector<1x16x32xf32>
    %137 = vector.shape_cast %136 : vector<1x16x32xf32> to vector<16x32xf32>
    %138 = vector.shape_cast %135 : vector<16x32xf32> to vector<1x16x32xf32>
    tpu.vector_store %arg17[%c0_61, %c0_62, %c0_63], %138 {strides = array<i32>} : memref<1x16x32xf32, #tpu.memory_space<vmem>>, vector<1x16x32xf32>,
    return
  }
  func.func @transform_0(%arg0: i32) -> (i32, i32, i32) {
    %c0_i32 = arith.constant 0 : i32
    %c0_i32_0 = arith.constant 0 : i32
    %c0_i32_1 = arith.constant 0 : i32
    return %arg0, %c0_i32, %c0_i32_0 : i32, i32, i32
  }
  func.func @transform_1(%arg0: i32) -> (i32, i32) {
    %c0_i32 = arith.constant 0 : i32
    %c0_i32_0 = arith.constant 0 : i32
    %c0_i32_1 = arith.constant 0 : i32
    return %c0_i32, %c0_i32_0 : i32, i32
  }
  func.func @transform_2(%arg0: i32) -> (i32, i32) {
    %c0_i32 = arith.constant 0 : i32
    %c0_i32_0 = arith.constant 0 : i32
    %c0_i32_1 = arith.constant 0 : i32
    return %c0_i32, %c0_i32_0 : i32, i32
  }
  func.func @transform_3(%arg0: i32) -> (i32, i32) {
    %c0_i32 = arith.constant 0 : i32
    %c0_i32_0 = arith.constant 0 : i32
    %c0_i32_1 = arith.constant 0 : i32
    return %c0_i32, %c0_i32_0 : i32, i32
  }
  func.func @transform_4(%arg0: i32) -> (i32, i32) {
    %c0_i32 = arith.constant 0 : i32
    %c0_i32_0 = arith.constant 0 : i32
    %c0_i32_1 = arith.constant 0 : i32
    return %c0_i32, %c0_i32_0 : i32, i32
  }
  func.func @transform_5(%arg0: i32) -> (i32, i32) {
    %c0_i32 = arith.constant 0 : i32
    %c0_i32_0 = arith.constant 0 : i32
    %c0_i32_1 = arith.constant 0 : i32
    return %c0_i32, %c0_i32_0 : i32, i32
  }
  func.func @transform_6(%arg0: i32) -> (i32, i32) {
    %c0_i32 = arith.constant 0 : i32
    %c0_i32_0 = arith.constant 0 : i32
    %c0_i32_1 = arith.constant 0 : i32
    return %c0_i32, %c0_i32_0 : i32, i32
  }
  func.func @transform_7(%arg0: i32) -> (i32, i32) {
    %c0_i32 = arith.constant 0 : i32
    %c0_i32_0 = arith.constant 0 : i32
    %c0_i32_1 = arith.constant 0 : i32
    return %c0_i32, %c0_i32_0 : i32, i32
  }
  func.func @transform_8(%arg0: i32) -> (i32, i32) {
    %c0_i32 = arith.constant 0 : i32
    %c0_i32_0 = arith.constant 0 : i32
    %c0_i32_1 = arith.constant 0 : i32
    return %c0_i32, %c0_i32_0 : i32, i32
  }
  func.func @transform_9(%arg0: i32) -> (i32, i32) {
    %c0_i32 = arith.constant 0 : i32
    %c0_i32_0 = arith.constant 0 : i32
    %c0_i32_1 = arith.constant 0 : i32
    return %c0_i32, %c0_i32_0 : i32, i32
  }
  func.func @transform_10(%arg0: i32) -> (i32, i32) {
    %c0_i32 = arith.constant 0 : i32
    %c0_i32_0 = arith.constant 0 : i32
    %c0_i32_1 = arith.constant 0 : i32
    return %c0_i32, %c0_i32_0 : i32, i32
  }
  func.func @transform_11(%arg0: i32) -> (i32, i32) {
    %c0_i32 = arith.constant 0 : i32
    %c0_i32_0 = arith.constant 0 : i32
    %c0_i32_1 = arith.constant 0 : i32
    return %c0_i32, %c0_i32_0 : i32, i32
  }
  func.func @transform_12(%arg0: i32) -> (i32, i32) {
    %c0_i32 = arith.constant 0 : i32
    %c0_i32_0 = arith.constant 0 : i32
    %c0_i32_1 = arith.constant 0 : i32
    return %c0_i32, %c0_i32_0 : i32, i32
  }
  func.func @transform_13(%arg0: i32) -> (i32, i32) {
    %c0_i32 = arith.constant 0 : i32
    %c0_i32_0 = arith.constant 0 : i32
    %c0_i32_1 = arith.constant 0 : i32
    return %c0_i32, %c0_i32_0 : i32, i32
  }
  func.func @transform_14(%arg0: i32) -> (i32, i32) {
    %c0_i32 = arith.constant 0 : i32
    %c0_i32_0 = arith.constant 0 : i32
    %c0_i32_1 = arith.constant 0 : i32
    return %c0_i32, %c0_i32_0 : i32, i32
  }
  func.func @transform_15(%arg0: i32) -> (i32, i32) {
    %c0_i32 = arith.constant 0 : i32
    %c0_i32_0 = arith.constant 0 : i32
    %c0_i32_1 = arith.constant 0 : i32
    return %c0_i32, %c0_i32_0 : i32, i32
  }
  func.func @transform_16(%arg0: i32) -> (i32, i32, i32) {
    %c0_i32 = arith.constant 0 : i32
    %c0_i32_0 = arith.constant 0 : i32
    %c0_i32_1 = arith.constant 0 : i32
    return %arg0, %c0_i32, %c0_i32_0 : i32, i32, i32
  }
}

module attributes {stable_mosaic.version = 11 : i64} {
  func.func @_fused_layer_kernel(%arg0: i32, %arg1: memref<1x16x32xf32, #tpu.memory_space<vmem>>, %arg2: memref<16x32xf32, #tpu.memory_space<vmem>>, %arg3: memref<32x96xf32, #tpu.memory_space<vmem>>, %arg4: memref<1x96xf32, #tpu.memory_space<vmem>>, %arg5: memref<32x32xf32, #tpu.memory_space<vmem>>, %arg6: memref<1x32xf32, #tpu.memory_space<vmem>>, %arg7: memref<1x32xf32, #tpu.memory_space<vmem>>, %arg8: memref<1x32xf32, #tpu.memory_space<vmem>>, %arg9: memref<32x64xf32, #tpu.memory_space<vmem>>, %arg10: memref<1x64xf32, #tpu.memory_space<vmem>>, %arg11: memref<64x32xf32, #tpu.memory_space<vmem>>, %arg12: memref<1x32xf32, #tpu.memory_space<vmem>>, %arg13: memref<1x32xf32, #tpu.memory_space<vmem>>, %arg14: memref<1x32xf32, #tpu.memory_space<vmem>>, %arg15: memref<1x32xf32, #tpu.memory_space<vmem>>, %arg16: memref<1x32xf32, #tpu.memory_space<vmem>>, %arg17: memref<1x16x32xf32, #tpu.memory_space<vmem>>) attributes {dimension_semantics = [#tpu.dimension_semantics<parallel>], iteration_bounds = array<i64: 2>, scalar_prefetch = 0 : i64, scratch_operands = 0 : i64, tpu.core_type = #tpu.core_type<tc>, window_params = [{transform_indices = @transform_0, window_bounds = array<i64: 1, 16, 32>}, {pipeline_mode = #tpu.pipeline_mode<synchronous>, transform_indices = @transform_1, window_bounds = array<i64: 16, 32>}, {pipeline_mode = #tpu.pipeline_mode<synchronous>, transform_indices = @transform_2, window_bounds = array<i64: 32, 96>}, {pipeline_mode = #tpu.pipeline_mode<synchronous>, transform_indices = @transform_3, window_bounds = array<i64: 1, 96>}, {pipeline_mode = #tpu.pipeline_mode<synchronous>, transform_indices = @transform_4, window_bounds = array<i64: 32, 32>}, {pipeline_mode = #tpu.pipeline_mode<synchronous>, transform_indices = @transform_5, window_bounds = array<i64: 1, 32>}, {pipeline_mode = #tpu.pipeline_mode<synchronous>, transform_indices = @transform_6, window_bounds = array<i64: 1, 32>}, {pipeline_mode = #tpu.pipeline_mode<synchronous>, transform_indices = @transform_7, window_bounds = array<i64: 1, 32>}, {pipeline_mode = #tpu.pipeline_mode<synchronous>, transform_indices = @transform_8, window_bounds = array<i64: 32, 64>}, {pipeline_mode = #tpu.pipeline_mode<synchronous>, transform_indices = @transform_9, window_bounds = array<i64: 1, 64>}, {pipeline_mode = #tpu.pipeline_mode<synchronous>, transform_indices = @transform_10, window_bounds = array<i64: 64, 32>}, {pipeline_mode = #tpu.pipeline_mode<synchronous>, transform_indices = @transform_11, window_bounds = array<i64: 1, 32>}, {pipeline_mode = #tpu.pipeline_mode<synchronous>, transform_indices = @transform_12, window_bounds = array<i64: 1, 32>}, {pipeline_mode = #tpu.pipeline_mode<synchronous>, transform_indices = @transform_13, window_bounds = array<i64: 1, 32>}, {pipeline_mode = #tpu.pipeline_mode<synchronous>, transform_indices = @transform_14, window_bounds = array<i64: 1, 32>}, {pipeline_mode = #tpu.pipeline_mode<synchronous>, transform_indices = @transform_15, window_bounds = array<i64: 1, 32>}, {transform_indices = @transform_16, window_bounds = array<i64: 1, 16, 32>}]} {
    %c0 = arith.constant 0 : index
    %c0_0 = arith.constant 0 : index
    %c0_1 = arith.constant 0 : index
    %0 = vector.load %arg1[%c0, %c0_0, %c0_1] : memref<1x16x32xf32, #tpu.memory_space<vmem>>, vector<1x16x32xf32>
    %1 = vector.shape_cast %0 : vector<1x16x32xf32> to vector<16x32xf32>
    %c0_2 = arith.constant 0 : index
    %c0_3 = arith.constant 0 : index
    %2 = vector.load %arg2[%c0_2, %c0_3] : memref<16x32xf32, #tpu.memory_space<vmem>>, vector<16x32xf32>
    %3 = arith.addf %1, %2 : vector<16x32xf32>
    %c0_4 = arith.constant 0 : index
    %c0_5 = arith.constant 0 : index
    %4 = vector.load %arg3[%c0_4, %c0_5] : memref<32x96xf32, #tpu.memory_space<vmem>>, vector<32x96xf32>
    %cst = arith.constant dense<0.000000e+00> : vector<16x96xf32>
    %5 = tpu.matmul %3, %4, %cst {dimension_numbers = #tpu.dot_dimension_numbers<[1], [0], [0], [1], [0, 0, 1, 1], [], []>} : vector<16x32xf32>, vector<32x96xf32>, vector<16x96xf32> -> vector<16x96xf32>
    %c0_6 = arith.constant 0 : index
    %c0_7 = arith.constant 0 : index
    %6 = vector.load %arg4[%c0_6, %c0_7] : memref<1x96xf32, #tpu.memory_space<vmem>>, vector<1x96xf32>
    %7 = vector.broadcast %6 : vector<1x96xf32> to vector<16x96xf32>
    %8 = arith.addf %5, %7 : vector<16x96xf32>
    %9 = tpu.iota {dimensions = array<i32: 0>} : vector<16x16xi32>
    %10 = tpu.iota {dimensions = array<i32: 1>} : vector<16x16xi32>
    %11 = arith.cmpi sle, %10, %9 : vector<16x16xi32>
    %12 = vector.extract_strided_slice %8 {offsets = [0, 0], sizes = [16, 16], strides = [1, 1]} : vector<16x96xf32> to vector<16x16xf32>
    %13 = vector.extract_strided_slice %8 {offsets = [0, 32], sizes = [16, 16], strides = [1, 1]} : vector<16x96xf32> to vector<16x16xf32>
    %14 = vector.extract_strided_slice %8 {offsets = [0, 64], sizes = [16, 16], strides = [1, 1]} : vector<16x96xf32> to vector<16x16xf32>
    %15 = tpu.transpose %13, [1, 0] : vector<16x16xf32> -> vector<16x16xf32>
    %cst_8 = arith.constant dense<0.000000e+00> : vector<16x16xf32>
    %16 = tpu.matmul %12, %15, %cst_8 {dimension_numbers = #tpu.dot_dimension_numbers<[1], [0], [0], [1], [0, 0, 1, 1], [], []>} : vector<16x16xf32>, vector<16x16xf32>, vector<16x16xf32> -> vector<16x16xf32>
    %cst_9 = arith.constant 2.500000e-01 : f32
    %17 = vector.broadcast %cst_9 : f32 to vector<16x16xf32>
    %18 = arith.mulf %16, %17 : vector<16x16xf32>
    %cst_10 = arith.constant -1.000000e+30 : f32
    %19 = vector.broadcast %cst_10 : f32 to vector<16x16xf32>
    %20 = arith.select %11, %18, %19 : vector<16x16xi1>, vector<16x16xf32>
    %cst_11 = arith.constant dense<0xFF800000> : vector<16xf32>
    %21 = vector.multi_reduction <maximumf>, %20, %cst_11 [1] : vector<16x16xf32> to vector<16xf32>
    %22 = vector.shape_cast %21 : vector<16xf32> to vector<16x1xf32>
    %23 = vector.broadcast %22 : vector<16x1xf32> to vector<16x16xf32>
    %24 = arith.subf %20, %23 : vector<16x16xf32>
    %25 = math.exp %24 : vector<16x16xf32>
    %cst_12 = arith.constant dense<0.000000e+00> : vector<16xf32>
    %26 = vector.multi_reduction <add>, %25, %cst_12 [1] : vector<16x16xf32> to vector<16xf32>
    %27 = vector.shape_cast %26 : vector<16xf32> to vector<16x1xf32>
    %cst_13 = arith.constant dense<0.000000e+00> : vector<16x16xf32>
    %28 = tpu.matmul %25, %14, %cst_13 {dimension_numbers = #tpu.dot_dimension_numbers<[1], [0], [0], [1], [0, 0, 1, 1], [], []>} : vector<16x16xf32>, vector<16x16xf32>, vector<16x16xf32> -> vector<16x16xf32>
    %29 = tpu.reciprocal %27 {approx = true} : vector<16x1xf32> -> vector<16x1xf32>
    %30 = vector.broadcast %29 : vector<16x1xf32> to vector<16x16xf32>
    %31 = arith.mulf %28, %30 : vector<16x16xf32>
    %32 = vector.extract_strided_slice %8 {offsets = [0, 16], sizes = [16, 16], strides = [1, 1]} : vector<16x96xf32> to vector<16x16xf32>
    %33 = vector.extract_strided_slice %8 {offsets = [0, 48], sizes = [16, 16], strides = [1, 1]} : vector<16x96xf32> to vector<16x16xf32>
    %34 = vector.extract_strided_slice %8 {offsets = [0, 80], sizes = [16, 16], strides = [1, 1]} : vector<16x96xf32> to vector<16x16xf32>
    %35 = tpu.transpose %33, [1, 0] : vector<16x16xf32> -> vector<16x16xf32>
    %cst_14 = arith.constant dense<0.000000e+00> : vector<16x16xf32>
    %36 = tpu.matmul %32, %35, %cst_14 {dimension_numbers = #tpu.dot_dimension_numbers<[1], [0], [0], [1], [0, 0, 1, 1], [], []>} : vector<16x16xf32>, vector<16x16xf32>, vector<16x16xf32> -> vector<16x16xf32>
    %cst_15 = arith.constant 2.500000e-01 : f32
    %37 = vector.broadcast %cst_15 : f32 to vector<16x16xf32>
    %38 = arith.mulf %36, %37 : vector<16x16xf32>
    %cst_16 = arith.constant -1.000000e+30 : f32
    %39 = vector.broadcast %cst_16 : f32 to vector<16x16xf32>
    %40 = arith.select %11, %38, %39 : vector<16x16xi1>, vector<16x16xf32>
    %cst_17 = arith.constant dense<0xFF800000> : vector<16xf32>
    %41 = vector.multi_reduction <maximumf>, %40, %cst_17 [1] : vector<16x16xf32> to vector<16xf32>
    %42 = vector.shape_cast %41 : vector<16xf32> to vector<16x1xf32>
    %43 = vector.broadcast %42 : vector<16x1xf32> to vector<16x16xf32>
    %44 = arith.subf %40, %43 : vector<16x16xf32>
    %45 = math.exp %44 : vector<16x16xf32>
    %cst_18 = arith.constant dense<0.000000e+00> : vector<16xf32>
    %46 = vector.multi_reduction <add>, %45, %cst_18 [1] : vector<16x16xf32> to vector<16xf32>
    %47 = vector.shape_cast %46 : vector<16xf32> to vector<16x1xf32>
    %cst_19 = arith.constant dense<0.000000e+00> : vector<16x16xf32>
    %48 = tpu.matmul %45, %34, %cst_19 {dimension_numbers = #tpu.dot_dimension_numbers<[1], [0], [0], [1], [0, 0, 1, 1], [], []>} : vector<16x16xf32>, vector<16x16xf32>, vector<16x16xf32> -> vector<16x16xf32>
    %49 = tpu.reciprocal %47 {approx = true} : vector<16x1xf32> -> vector<16x1xf32>
    %50 = vector.broadcast %49 : vector<16x1xf32> to vector<16x16xf32>
    %51 = arith.mulf %48, %50 : vector<16x16xf32>
    %52 = tpu.concatenate %31, %51 in 1 : vector<16x16xf32>, vector<16x16xf32> -> vector<16x32xf32>
    %c0_20 = arith.constant 0 : index
    %c0_21 = arith.constant 0 : index
    %53 = vector.load %arg5[%c0_20, %c0_21] : memref<32x32xf32, #tpu.memory_space<vmem>>, vector<32x32xf32>
    %cst_22 = arith.constant dense<0.000000e+00> : vector<16x32xf32>
    %54 = tpu.matmul %52, %53, %cst_22 {dimension_numbers = #tpu.dot_dimension_numbers<[1], [0], [0], [1], [0, 0, 1, 1], [], []>} : vector<16x32xf32>, vector<32x32xf32>, vector<16x32xf32> -> vector<16x32xf32>
    %c0_23 = arith.constant 0 : index
    %c0_24 = arith.constant 0 : index
    %55 = vector.load %arg6[%c0_23, %c0_24] : memref<1x32xf32, #tpu.memory_space<vmem>>, vector<1x32xf32>
    %56 = vector.broadcast %55 : vector<1x32xf32> to vector<16x32xf32>
    %57 = arith.addf %54, %56 : vector<16x32xf32>
    %58 = arith.addf %3, %57 : vector<16x32xf32>
    %cst_25 = arith.constant dense<0.000000e+00> : vector<16xf32>
    %59 = vector.multi_reduction <add>, %58, %cst_25 [1] : vector<16x32xf32> to vector<16xf32>
    %60 = vector.shape_cast %59 : vector<16xf32> to vector<16x1xf32>
    %cst_26 = arith.constant 3.200000e+01 : f32
    %61 = vector.broadcast %cst_26 : f32 to vector<16x1xf32>
    %62 = arith.divf %60, %61 : vector<16x1xf32>
    %63 = vector.broadcast %62 : vector<16x1xf32> to vector<16x32xf32>
    %64 = arith.subf %58, %63 : vector<16x32xf32>
    %65 = arith.mulf %64, %64 : vector<16x32xf32>
    %cst_27 = arith.constant dense<0.000000e+00> : vector<16xf32>
    %66 = vector.multi_reduction <add>, %65, %cst_27 [1] : vector<16x32xf32> to vector<16xf32>
    %67 = vector.shape_cast %66 : vector<16xf32> to vector<16x1xf32>
    %cst_28 = arith.constant 3.200000e+01 : f32
    %68 = vector.broadcast %cst_28 : f32 to vector<16x1xf32>
    %69 = arith.divf %67, %68 : vector<16x1xf32>
    %cst_29 = arith.constant 9.99999974E-6 : f32
    %70 = vector.broadcast %cst_29 : f32 to vector<16x1xf32>
    %71 = arith.addf %69, %70 : vector<16x1xf32>
    %72 = math.rsqrt %71 : vector<16x1xf32>
    %73 = vector.broadcast %72 : vector<16x1xf32> to vector<16x32xf32>
    %74 = arith.mulf %64, %73 : vector<16x32xf32>
    %c0_30 = arith.constant 0 : index
    %c0_31 = arith.constant 0 : index
    %75 = vector.load %arg7[%c0_30, %c0_31] : memref<1x32xf32, #tpu.memory_space<vmem>>, vector<1x32xf32>
    %76 = vector.broadcast %75 : vector<1x32xf32> to vector<16x32xf32>
    %77 = arith.mulf %74, %76 : vector<16x32xf32>
    %c0_32 = arith.constant 0 : index
    %c0_33 = arith.constant 0 : index
    %78 = vector.load %arg8[%c0_32, %c0_33] : memref<1x32xf32, #tpu.memory_space<vmem>>, vector<1x32xf32>
    %79 = vector.broadcast %78 : vector<1x32xf32> to vector<16x32xf32>
    %80 = arith.addf %77, %79 : vector<16x32xf32>
    %c0_34 = arith.constant 0 : index
    %c0_35 = arith.constant 0 : index
    %81 = vector.load %arg9[%c0_34, %c0_35] : memref<32x64xf32, #tpu.memory_space<vmem>>, vector<32x64xf32>
    %cst_36 = arith.constant dense<0.000000e+00> : vector<16x64xf32>
    %82 = tpu.matmul %80, %81, %cst_36 {dimension_numbers = #tpu.dot_dimension_numbers<[1], [0], [0], [1], [0, 0, 1, 1], [], []>} : vector<16x32xf32>, vector<32x64xf32>, vector<16x64xf32> -> vector<16x64xf32>
    %c0_37 = arith.constant 0 : index
    %c0_38 = arith.constant 0 : index
    %83 = vector.load %arg10[%c0_37, %c0_38] : memref<1x64xf32, #tpu.memory_space<vmem>>, vector<1x64xf32>
    %84 = vector.broadcast %83 : vector<1x64xf32> to vector<16x64xf32>
    %85 = arith.addf %82, %84 : vector<16x64xf32>
    %cst_39 = arith.constant 0.000000e+00 : f32
    %86 = vector.broadcast %cst_39 : f32 to vector<16x64xf32>
    %87 = arith.maximumf %85, %86 : vector<16x64xf32>
    %c0_40 = arith.constant 0 : index
    %c0_41 = arith.constant 0 : index
    %88 = vector.load %arg11[%c0_40, %c0_41] : memref<64x32xf32, #tpu.memory_space<vmem>>, vector<64x32xf32>
    %cst_42 = arith.constant dense<0.000000e+00> : vector<16x32xf32>
    %89 = tpu.matmul %87, %88, %cst_42 {dimension_numbers = #tpu.dot_dimension_numbers<[1], [0], [0], [1], [0, 0, 1, 1], [], []>} : vector<16x64xf32>, vector<64x32xf32>, vector<16x32xf32> -> vector<16x32xf32>
    %c0_43 = arith.constant 0 : index
    %c0_44 = arith.constant 0 : index
    %90 = vector.load %arg12[%c0_43, %c0_44] : memref<1x32xf32, #tpu.memory_space<vmem>>, vector<1x32xf32>
    %91 = vector.broadcast %90 : vector<1x32xf32> to vector<16x32xf32>
    %92 = arith.addf %89, %91 : vector<16x32xf32>
    %93 = arith.addf %80, %92 : vector<16x32xf32>
    %cst_45 = arith.constant dense<0.000000e+00> : vector<16xf32>
    %94 = vector.multi_reduction <add>, %93, %cst_45 [1] : vector<16x32xf32> to vector<16xf32>
    %95 = vector.shape_cast %94 : vector<16xf32> to vector<16x1xf32>
    %cst_46 = arith.constant 3.200000e+01 : f32
    %96 = vector.broadcast %cst_46 : f32 to vector<16x1xf32>
    %97 = arith.divf %95, %96 : vector<16x1xf32>
    %98 = vector.broadcast %97 : vector<16x1xf32> to vector<16x32xf32>
    %99 = arith.subf %93, %98 : vector<16x32xf32>
    %100 = arith.mulf %99, %99 : vector<16x32xf32>
    %cst_47 = arith.constant dense<0.000000e+00> : vector<16xf32>
    %101 = vector.multi_reduction <add>, %100, %cst_47 [1] : vector<16x32xf32> to vector<16xf32>
    %102 = vector.shape_cast %101 : vector<16xf32> to vector<16x1xf32>
    %cst_48 = arith.constant 3.200000e+01 : f32
    %103 = vector.broadcast %cst_48 : f32 to vector<16x1xf32>
    %104 = arith.divf %102, %103 : vector<16x1xf32>
    %cst_49 = arith.constant 9.99999974E-6 : f32
    %105 = vector.broadcast %cst_49 : f32 to vector<16x1xf32>
    %106 = arith.addf %104, %105 : vector<16x1xf32>
    %107 = math.rsqrt %106 : vector<16x1xf32>
    %108 = vector.broadcast %107 : vector<16x1xf32> to vector<16x32xf32>
    %109 = arith.mulf %99, %108 : vector<16x32xf32>
    %c0_50 = arith.constant 0 : index
    %c0_51 = arith.constant 0 : index
    %110 = vector.load %arg13[%c0_50, %c0_51] : memref<1x32xf32, #tpu.memory_space<vmem>>, vector<1x32xf32>
    %111 = vector.broadcast %110 : vector<1x32xf32> to vector<16x32xf32>
    %112 = arith.mulf %109, %111 : vector<16x32xf32>
    %c0_52 = arith.constant 0 : index
    %c0_53 = arith.constant 0 : index
    %113 = vector.load %arg14[%c0_52, %c0_53] : memref<1x32xf32, #tpu.memory_space<vmem>>, vector<1x32xf32>
    %114 = vector.broadcast %113 : vector<1x32xf32> to vector<16x32xf32>
    %115 = arith.addf %112, %114 : vector<16x32xf32>
    %c0_54 = arith.constant 0 : index
    %c0_55 = arith.constant 0 : index
    %c0_56 = arith.constant 0 : index
    %116 = vector.load %arg17[%c0_54, %c0_55, %c0_56] : memref<1x16x32xf32, #tpu.memory_space<vmem>>, vector<1x16x32xf32>
    %117 = vector.shape_cast %116 : vector<1x16x32xf32> to vector<16x32xf32>
    %118 = vector.shape_cast %115 : vector<16x32xf32> to vector<1x16x32xf32>
    tpu.vector_store %arg17[%c0_54, %c0_55, %c0_56], %118 {strides = array<i32>} : memref<1x16x32xf32, #tpu.memory_space<vmem>>, vector<1x16x32xf32>,
    return
  }
  func.func @transform_0(%arg0: i32) -> (i32, i32, i32) {
    %c0_i32 = arith.constant 0 : i32
    %c0_i32_0 = arith.constant 0 : i32
    %c0_i32_1 = arith.constant 0 : i32
    return %arg0, %c0_i32, %c0_i32_0 : i32, i32, i32
  }
  func.func @transform_1(%arg0: i32) -> (i32, i32) {
    %c0_i32 = arith.constant 0 : i32
    %c0_i32_0 = arith.constant 0 : i32
    %c0_i32_1 = arith.constant 0 : i32
    return %c0_i32, %c0_i32_0 : i32, i32
  }
  func.func @transform_2(%arg0: i32) -> (i32, i32) {
    %c0_i32 = arith.constant 0 : i32
    %c0_i32_0 = arith.constant 0 : i32
    %c0_i32_1 = arith.constant 0 : i32
    return %c0_i32, %c0_i32_0 : i32, i32
  }
  func.func @transform_3(%arg0: i32) -> (i32, i32) {
    %c0_i32 = arith.constant 0 : i32
    %c0_i32_0 = arith.constant 0 : i32
    %c0_i32_1 = arith.constant 0 : i32
    return %c0_i32, %c0_i32_0 : i32, i32
  }
  func.func @transform_4(%arg0: i32) -> (i32, i32) {
    %c0_i32 = arith.constant 0 : i32
    %c0_i32_0 = arith.constant 0 : i32
    %c0_i32_1 = arith.constant 0 : i32
    return %c0_i32, %c0_i32_0 : i32, i32
  }
  func.func @transform_5(%arg0: i32) -> (i32, i32) {
    %c0_i32 = arith.constant 0 : i32
    %c0_i32_0 = arith.constant 0 : i32
    %c0_i32_1 = arith.constant 0 : i32
    return %c0_i32, %c0_i32_0 : i32, i32
  }
  func.func @transform_6(%arg0: i32) -> (i32, i32) {
    %c0_i32 = arith.constant 0 : i32
    %c0_i32_0 = arith.constant 0 : i32
    %c0_i32_1 = arith.constant 0 : i32
    return %c0_i32, %c0_i32_0 : i32, i32
  }
  func.func @transform_7(%arg0: i32) -> (i32, i32) {
    %c0_i32 = arith.constant 0 : i32
    %c0_i32_0 = arith.constant 0 : i32
    %c0_i32_1 = arith.constant 0 : i32
    return %c0_i32, %c0_i32_0 : i32, i32
  }
  func.func @transform_8(%arg0: i32) -> (i32, i32) {
    %c0_i32 = arith.constant 0 : i32
    %c0_i32_0 = arith.constant 0 : i32
    %c0_i32_1 = arith.constant 0 : i32
    return %c0_i32, %c0_i32_0 : i32, i32
  }
  func.func @transform_9(%arg0: i32) -> (i32, i32) {
    %c0_i32 = arith.constant 0 : i32
    %c0_i32_0 = arith.constant 0 : i32
    %c0_i32_1 = arith.constant 0 : i32
    return %c0_i32, %c0_i32_0 : i32, i32
  }
  func.func @transform_10(%arg0: i32) -> (i32, i32) {
    %c0_i32 = arith.constant 0 : i32
    %c0_i32_0 = arith.constant 0 : i32
    %c0_i32_1 = arith.constant 0 : i32
    return %c0_i32, %c0_i32_0 : i32, i32
  }
  func.func @transform_11(%arg0: i32) -> (i32, i32) {
    %c0_i32 = arith.constant 0 : i32
    %c0_i32_0 = arith.constant 0 : i32
    %c0_i32_1 = arith.constant 0 : i32
    return %c0_i32, %c0_i32_0 : i32, i32
  }
  func.func @transform_12(%arg0: i32) -> (i32, i32) {
    %c0_i32 = arith.constant 0 : i32
    %c0_i32_0 = arith.constant 0 : i32
    %c0_i32_1 = arith.constant 0 : i32
    return %c0_i32, %c0_i32_0 : i32, i32
  }
  func.func @transform_13(%arg0: i32) -> (i32, i32) {
    %c0_i32 = arith.constant 0 : i32
    %c0_i32_0 = arith.constant 0 : i32
    %c0_i32_1 = arith.constant 0 : i32
    return %c0_i32, %c0_i32_0 : i32, i32
  }
  func.func @transform_14(%arg0: i32) -> (i32, i32) {
    %c0_i32 = arith.constant 0 : i32
    %c0_i32_0 = arith.constant 0 : i32
    %c0_i32_1 = arith.constant 0 : i32
    return %c0_i32, %c0_i32_0 : i32, i32
  }
  func.func @transform_15(%arg0: i32) -> (i32, i32) {
    %c0_i32 = arith.constant 0 : i32
    %c0_i32_0 = arith.constant 0 : i32
    %c0_i32_1 = arith.constant 0 : i32
    return %c0_i32, %c0_i32_0 : i32, i32
  }
  func.func @transform_16(%arg0: i32) -> (i32, i32, i32) {
    %c0_i32 = arith.constant 0 : i32
    %c0_i32_0 = arith.constant 0 : i32
    %c0_i32_1 = arith.constant 0 : i32
    return %arg0, %c0_i32, %c0_i32_0 : i32, i32, i32
  }
}

</mosaic_0001>

<llo_original>
// kernel: _lambda_.2
$region0: #{_lambda_.2}
  #allocation0 [shape = 'u32[]', space=smem, size = 0x4, offset = 0x4, fixed_abs, tag = 'smem constant byte address 0x4 - core index']
  #allocation1 [shape = 'u32[72,128]{1,0:T(1,128)}', space=vmem, size = 0x9000, scoped, tag = 'internal scratch']
  %s0 = inlined_call_operand.vmem [shape: f32[2,16,32], index: 0, kind: input, shape index: {}]
  %s1 = inlined_call_operand.vmem [shape: f32[16,32], index: 1, kind: input, shape index: {}]
  %s2 = inlined_call_operand.vmem [shape: f32[32,96], index: 2, kind: input, shape index: {}]
  %s3 = inlined_call_operand.vmem [shape: f32[1,96], index: 3, kind: input, shape index: {}]
  %s4 = inlined_call_operand.hbm [shape: f32[32,32], index: 4, kind: input, shape index: {}]
  %s5 = inlined_call_operand.vmem [shape: f32[1,32], index: 5, kind: input, shape index: {}]
  %s6 = inlined_call_operand.vmem [shape: f32[1,32], index: 6, kind: input, shape index: {}]
  %s7 = inlined_call_operand.vmem [shape: f32[1,32], index: 7, kind: input, shape index: {}]
  %s8 = inlined_call_operand.hbm [shape: f32[32,64], index: 8, kind: input, shape index: {}]
  %s9 = inlined_call_operand.vmem [shape: f32[1,64], index: 9, kind: input, shape index: {}]
  %s10 = inlined_call_operand.vmem [shape: f32[64,32], index: 10, kind: input, shape index: {}]
  %s11 = inlined_call_operand.vmem [shape: f32[1,32], index: 11, kind: input, shape index: {}]
  %s12 = inlined_call_operand.vmem [shape: f32[1,32], index: 12, kind: input, shape index: {}]
  %s13 = inlined_call_operand.vmem [shape: f32[1,32], index: 13, kind: input, shape index: {}]
  %s14 = inlined_call_operand.vmem [shape: f32[1,32], index: 14, kind: input, shape index: {}]
  %s15 = inlined_call_operand.vmem [shape: f32[1,32], index: 15, kind: input, shape index: {}]
  %s16 = inlined_call_operand.vmem [shape: f32[2,16,32], index: 16, kind: output, shape index: {}]
  %s17 = sld [smem:[#allocation0]]
  $region105: #{_lambda_.2} parent=0
    _
  %s19 = ssub.s32 1, %s17
  %s20 = scalar_select 0, %s19, %s17
  $region1: #{_lambda_.2} parent=0
    #allocation2 [shape = 'u8[16384]{0}', space=vmem, size = 0x4000, scoped, tag = 'input window, operand 4, single buffered']
    #allocation3 [shape = 's32[2]{0}', space=sflag, size = 0x8, scoped, tag = 'scoped memory for _lambda_.2']
    #allocation4 [shape = 'u8[16384]{0}', space=vmem, size = 0x4000, scoped, tag = 'input window, operand 8, single buffered']
    #allocation5 [shape = 's32[1]{0}', space=sflag, size = 0x4, scoped, tag = 'scoped memory for _lambda_.2']
    %21 = vsyncpa [#allocation3], 0
    %22 = vsyncpa [#allocation5], 0
    loop: start=0, step=1, limit=4
    $region2: #{_lambda_.2} parent=1 // loop_pre_header
      _
    $region3: #{_lambda_.2} parent=1 // loop_header
      %s24 = sphi 0, %s28
      %p25 = scmp.ge.s32.totalorder %s24, 4
      %s34 = sphi 0, %s36
      %s37 = sphi 0, %s34
      %s38 = sphi 0, %s37
      %s54 = sphi 0, %s38
      %s58 = sphi 0, %s58
      %s60 = sphi 0, %s58
      %s61 = sphi 0, %s60
      %s75 = sphi 0, %s61
      %s79 = sphi 0, %s79
      %s81 = sphi 0, %s79
      %s82 = sphi 0, %s81
      %s96 = sphi 0, %s82
      %s100 = sphi 0, %s100
      %s102 = sphi 0, %s100
      %s103 = sphi 0, %s102
      %s117 = sphi 0, %s103
      %s121 = sphi 0, %s121
      %s123 = sphi 0, %s121
      %s124 = sphi 0, %s123
      %s138 = sphi 0, %s124
      %s142 = sphi 0, %s142
      %s144 = sphi 0, %s142
      %s145 = sphi 0, %s144
      %s159 = sphi 0, %s145
      %s163 = sphi 0, %s163
      %s165 = sphi 0, %s163
      %s166 = sphi 0, %s165
      %s180 = sphi 0, %s166
      %s184 = sphi 0, %s184
      %s186 = sphi 0, %s184
      %s187 = sphi 0, %s186
      %s201 = sphi 0, %s187
      %s205 = sphi 0, %s205
      %s207 = sphi 0, %s205
      %s208 = sphi 0, %s207
      %s222 = sphi 0, %s208
      %s226 = sphi 0, %s226
      %s228 = sphi 0, %s226
      %s229 = sphi 0, %s228
      %s243 = sphi 0, %s229
      %s247 = sphi 0, %s247
      %s249 = sphi 0, %s247
      %s250 = sphi 0, %s249
      %s264 = sphi 0, %s250
      %s268 = sphi 0, %s268
      %s270 = sphi 0, %s268
      %s271 = sphi 0, %s270
      %s285 = sphi 0, %s271
      %s289 = sphi 0, %s289
      %s291 = sphi 0, %s289
      %s292 = sphi 0, %s291
      %s306 = sphi 0, %s292
      %s310 = sphi 0, %s310
      %s312 = sphi 0, %s310
      %s313 = sphi 0, %s312
      %s327 = sphi 0, %s313
      %s331 = sphi 0, %s331
      %s333 = sphi 0, %s331
      %s334 = sphi 0, %s333
      %s348 = sphi 0, %s334
      %s352 = sphi 0, %s352
      %s354 = sphi 0, %s352
      %s355 = sphi 0, %s354
      %s369 = sphi 0, %s355
      %s375 = sphi 0, %s377
      %s378 = sphi 0, %s375
      %s379 = sphi 0, %s378
      %s395 = sphi 0, %s379
    $region4: #{_lambda_.2} parent=1 // loop_header_branch
      %27 = sbr.rel (%p25) target = $region8
    $region5: #{_lambda_.2} parent=1 // loop_body
      %s29 = ssub.s32 %s24, 1
      %s30 = ssub.s32 %s24, 2
      %s31 = sadd.s32 %s24, 1
      %s32 = ssub.s32 %s24, %s31
      %p33 = scmp.eq.s32.totalorder %s32, 0
      %s35 = sadd.s32 %s34, 1
      %s36 = scalar_select %p33, %s34, %s35
      %p39 = pneg %p33
      %p40 = scmp.eq.s32.totalorder %s24, 1
      %p41 = por %p39, %p40
      %p42 = scmp.ne.s32.totalorder %s34, %s37
      %p43 = scmp.eq.s32.totalorder %s24, 0
      %p44 = por %p42, %p43
      %p45 = scmp.ne.s32.totalorder %s34, %s37
      %p46 = scmp.eq.s32.totalorder %s29, 1
      %p47 = por %p45, %p46
      %p48 = scmp.ne.s32.totalorder %s37, %s38
      %p49 = scmp.eq.s32.totalorder %s29, 0
      %p50 = por %p48, %p49
      %p51 = scmp.ne.s32.totalorder %s37, %s38
      %p52 = scmp.eq.s32.totalorder %s30, 1
      %p53 = por %p51, %p52
      %p55 = scmp.ne.s32.totalorder %s38, %s54
      %p56 = scmp.eq.s32.totalorder %s30, 0
      %p57 = por %p55, %p56
      %s59 = sadd.s32 %s58, 1
      %p62 = scmp.eq.s32.totalorder %s24, 1
      %p63 = scmp.ne.s32.totalorder %s58, %s60
      %p64 = scmp.eq.s32.totalorder %s24, 0
      %p65 = por %p63, %p64
      %p66 = scmp.ne.s32.totalorder %s58, %s60
      %p67 = scmp.eq.s32.totalorder %s29, 1
      %p68 = por %p66, %p67
      %p69 = scmp.ne.s32.totalorder %s60, %s61
      %p70 = scmp.eq.s32.totalorder %s29, 0
      %p71 = por %p69, %p70
      %p72 = scmp.ne.s32.totalorder %s60, %s61
      %p73 = scmp.eq.s32.totalorder %s30, 1
      %p74 = por %p72, %p73
      %p76 = scmp.ne.s32.totalorder %s61, %s75
      %p77 = scmp.eq.s32.totalorder %s30, 0
      %p78 = por %p76, %p77
      %s80 = sadd.s32 %s79, 1
      %p83 = scmp.eq.s32.totalorder %s24, 1
      %p84 = scmp.ne.s32.totalorder %s79, %s81
      %p85 = scmp.eq.s32.totalorder %s24, 0
      %p86 = por %p84, %p85
      %p87 = scmp.ne.s32.totalorder %s79, %s81
      %p88 = scmp.eq.s32.totalorder %s29, 1
      %p89 = por %p87, %p88
      %p90 = scmp.ne.s32.totalorder %s81, %s82
      %p91 = scmp.eq.s32.totalorder %s29, 0
      %p92 = por %p90, %p91
      %p93 = scmp.ne.s32.totalorder %s81, %s82
      %p94 = scmp.eq.s32.totalorder %s30, 1
      %p95 = por %p93, %p94
      %p97 = scmp.ne.s32.totalorder %s82, %s96
      %p98 = scmp.eq.s32.totalorder %s30, 0
      %p99 = por %p97, %p98
      %s101 = sadd.s32 %s100, 1
      %p104 = scmp.eq.s32.totalorder %s24, 1
      %p105 = scmp.ne.s32.totalorder %s100, %s102
      %p106 = scmp.eq.s32.totalorder %s24, 0
      %p107 = por %p105, %p106
      %p108 = scmp.ne.s32.totalorder %s100, %s102
      %p109 = scmp.eq.s32.totalorder %s29, 1
      %p110 = por %p108, %p109
      %p111 = scmp.ne.s32.totalorder %s102, %s103
      %p112 = scmp.eq.s32.totalorder %s29, 0
      %p113 = por %p111, %p112
      %p114 = scmp.ne.s32.totalorder %s102, %s103
      %p115 = scmp.eq.s32.totalorder %s30, 1
      %p116 = por %p114, %p115
      %p118 = scmp.ne.s32.totalorder %s103, %s117
      %p119 = scmp.eq.s32.totalorder %s30, 0
      %p120 = por %p118, %p119
      %s122 = sadd.s32 %s121, 1
      %p125 = scmp.eq.s32.totalorder %s24, 1
      %p126 = scmp.ne.s32.totalorder %s121, %s123
      %p127 = scmp.eq.s32.totalorder %s24, 0
      %p128 = por %p126, %p127
      %p129 = scmp.ne.s32.totalorder %s121, %s123
      %p130 = scmp.eq.s32.totalorder %s29, 1
      %p131 = por %p129, %p130
      %p132 = scmp.ne.s32.totalorder %s123, %s124
      %p133 = scmp.eq.s32.totalorder %s29, 0
      %p134 = por %p132, %p133
      %p135 = scmp.ne.s32.totalorder %s123, %s124
      %p136 = scmp.eq.s32.totalorder %s30, 1
      %p137 = por %p135, %p136
      %p139 = scmp.ne.s32.totalorder %s124, %s138
      %p140 = scmp.eq.s32.totalorder %s30, 0
      %p141 = por %p139, %p140
      %s143 = sadd.s32 %s142, 1
      %p146 = scmp.eq.s32.totalorder %s24, 1
      %p147 = scmp.ne.s32.totalorder %s142, %s144
      %p148 = scmp.eq.s32.totalorder %s24, 0
      %p149 = por %p147, %p148
      %p150 = scmp.ne.s32.totalorder %s142, %s144
      %p151 = scmp.eq.s32.totalorder %s29, 1
      %p152 = por %p150, %p151
      %p153 = scmp.ne.s32.totalorder %s144, %s145
      %p154 = scmp.eq.s32.totalorder %s29, 0
      %p155 = por %p153, %p154
      %p156 = scmp.ne.s32.totalorder %s144, %s145
      %p157 = scmp.eq.s32.totalorder %s30, 1
      %p158 = por %p156, %p157
      %p160 = scmp.ne.s32.totalorder %s145, %s159
      %p161 = scmp.eq.s32.totalorder %s30, 0
      %p162 = por %p160, %p161
      %s164 = sadd.s32 %s163, 1
      %p167 = scmp.eq.s32.totalorder %s24, 1
      %p168 = scmp.ne.s32.totalorder %s163, %s165
      %p169 = scmp.eq.s32.totalorder %s24, 0
      %p170 = por %p168, %p169
      %p171 = scmp.ne.s32.totalorder %s163, %s165
      %p172 = scmp.eq.s32.totalorder %s29, 1
      %p173 = por %p171, %p172
      %p174 = scmp.ne.s32.totalorder %s165, %s166
      %p175 = scmp.eq.s32.totalorder %s29, 0
      %p176 = por %p174, %p175
      %p177 = scmp.ne.s32.totalorder %s165, %s166
      %p178 = scmp.eq.s32.totalorder %s30, 1
      %p179 = por %p177, %p178
      %p181 = scmp.ne.s32.totalorder %s166, %s180
      %p182 = scmp.eq.s32.totalorder %s30, 0
      %p183 = por %p181, %p182
      %s185 = sadd.s32 %s184, 1
      %p188 = scmp.eq.s32.totalorder %s24, 1
      %p189 = scmp.ne.s32.totalorder %s184, %s186
      %p190 = scmp.eq.s32.totalorder %s24, 0
      %p191 = por %p189, %p190
      %p192 = scmp.ne.s32.totalorder %s184, %s186
      %p193 = scmp.eq.s32.totalorder %s29, 1
      %p194 = por %p192, %p193
      %p195 = scmp.ne.s32.totalorder %s186, %s187
      %p196 = scmp.eq.s32.totalorder %s29, 0
      %p197 = por %p195, %p196
      %p198 = scmp.ne.s32.totalorder %s186, %s187
      %p199 = scmp.eq.s32.totalorder %s30, 1
      %p200 = por %p198, %p199
      %p202 = scmp.ne.s32.totalorder %s187, %s201
      %p203 = scmp.eq.s32.totalorder %s30, 0
      %p204 = por %p202, %p203
      %s206 = sadd.s32 %s205, 1
      %p209 = scmp.eq.s32.totalorder %s24, 1
      %p210 = scmp.ne.s32.totalorder %s205, %s207
      %p211 = scmp.eq.s32.totalorder %s24, 0
      %p212 = por %p210, %p211
      %p213 = scmp.ne.s32.totalorder %s205, %s207
      %p214 = scmp.eq.s32.totalorder %s29, 1
      %p215 = por %p213, %p214
      %p216 = scmp.ne.s32.totalorder %s207, %s208
      %p217 = scmp.eq.s32.totalorder %s29, 0
      %p218 = por %p216, %p217
      %p219 = scmp.ne.s32.totalorder %s207, %s208
      %p220 = scmp.eq.s32.totalorder %s30, 1
      %p221 = por %p219, %p220
      %p223 = scmp.ne.s32.totalorder %s208, %s222
      %p224 = scmp.eq.s32.totalorder %s30, 0
      %p225 = por %p223, %p224
      %s227 = sadd.s32 %s226, 1
      %p230 = scmp.eq.s32.totalorder %s24, 1
      %p231 = scmp.ne.s32.totalorder %s226, %s228
      %p232 = scmp.eq.s32.totalorder %s24, 0
      %p233 = por %p231, %p232
      %p234 = scmp.ne.s32.totalorder %s226, %s228
      %p235 = scmp.eq.s32.totalorder %s29, 1
      %p236 = por %p234, %p235
      %p237 = scmp.ne.s32.totalorder %s228, %s229
      %p238 = scmp.eq.s32.totalorder %s29, 0
      %p239 = por %p237, %p238
      %p240 = scmp.ne.s32.totalorder %s228, %s229
      %p241 = scmp.eq.s32.totalorder %s30, 1
      %p242 = por %p240, %p241
      %p244 = scmp.ne.s32.totalorder %s229, %s243
      %p245 = scmp.eq.s32.totalorder %s30, 0
      %p246 = por %p244, %p245
      %s248 = sadd.s32 %s247, 1
      %p251 = scmp.eq.s32.totalorder %s24, 1
      %p252 = scmp.ne.s32.totalorder %s247, %s249
      %p253 = scmp.eq.s32.totalorder %s24, 0
      %p254 = por %p252, %p253
      %p255 = scmp.ne.s32.totalorder %s247, %s249
      %p256 = scmp.eq.s32.totalorder %s29, 1
      %p257 = por %p255, %p256
      %p258 = scmp.ne.s32.totalorder %s249, %s250
      %p259 = scmp.eq.s32.totalorder %s29, 0
      %p260 = por %p258, %p259
      %p261 = scmp.ne.s32.totalorder %s249, %s250
      %p262 = scmp.eq.s32.totalorder %s30, 1
      %p263 = por %p261, %p262
      %p265 = scmp.ne.s32.totalorder %s250, %s264
      %p266 = scmp.eq.s32.totalorder %s30, 0
      %p267 = por %p265, %p266
      %s269 = sadd.s32 %s268, 1
      %p272 = scmp.eq.s32.totalorder %s24, 1
      %p273 = scmp.ne.s32.totalorder %s268, %s270
      %p274 = scmp.eq.s32.totalorder %s24, 0
      %p275 = por %p273, %p274
      %p276 = scmp.ne.s32.totalorder %s268, %s270
      %p277 = scmp.eq.s32.totalorder %s29, 1
      %p278 = por %p276, %p277
      %p279 = scmp.ne.s32.totalorder %s270, %s271
      %p280 = scmp.eq.s32.totalorder %s29, 0
      %p281 = por %p279, %p280
      %p282 = scmp.ne.s32.totalorder %s270, %s271
      %p283 = scmp.eq.s32.totalorder %s30, 1
      %p284 = por %p282, %p283
      %p286 = scmp.ne.s32.totalorder %s271, %s285
      %p287 = scmp.eq.s32.totalorder %s30, 0
      %p288 = por %p286, %p287
      %s290 = sadd.s32 %s289, 1
      %p293 = scmp.eq.s32.totalorder %s24, 1
      %p294 = scmp.ne.s32.totalorder %s289, %s291
      %p295 = scmp.eq.s32.totalorder %s24, 0
      %p296 = por %p294, %p295
      %p297 = scmp.ne.s32.totalorder %s289, %s291
      %p298 = scmp.eq.s32.totalorder %s29, 1
      %p299 = por %p297, %p298
      %p300 = scmp.ne.s32.totalorder %s291, %s292
      %p301 = scmp.eq.s32.totalorder %s29, 0
      %p302 = por %p300, %p301
      %p303 = scmp.ne.s32.totalorder %s291, %s292
      %p304 = scmp.eq.s32.totalorder %s30, 1
      %p305 = por %p303, %p304
      %p307 = scmp.ne.s32.totalorder %s292, %s306
      %p308 = scmp.eq.s32.totalorder %s30, 0
      %p309 = por %p307, %p308
      %s311 = sadd.s32 %s310, 1
      %p314 = scmp.eq.s32.totalorder %s24, 1
      %p315 = scmp.ne.s32.totalorder %s310, %s312
      %p316 = scmp.eq.s32.totalorder %s24, 0
      %p317 = por %p315, %p316
      %p318 = scmp.ne.s32.totalorder %s310, %s312
      %p319 = scmp.eq.s32.totalorder %s29, 1
      %p320 = por %p318, %p319
      %p321 = scmp.ne.s32.totalorder %s312, %s313
      %p322 = scmp.eq.s32.totalorder %s29, 0
      %p323 = por %p321, %p322
      %p324 = scmp.ne.s32.totalorder %s312, %s313
      %p325 = scmp.eq.s32.totalorder %s30, 1
      %p326 = por %p324, %p325
      %p328 = scmp.ne.s32.totalorder %s313, %s327
      %p329 = scmp.eq.s32.totalorder %s30, 0
      %p330 = por %p328, %p329
      %s332 = sadd.s32 %s331, 1
      %p335 = scmp.eq.s32.totalorder %s24, 1
      %p336 = scmp.ne.s32.totalorder %s331, %s333
      %p337 = scmp.eq.s32.totalorder %s24, 0
      %p338 = por %p336, %p337
      %p339 = scmp.ne.s32.totalorder %s331, %s333
      %p340 = scmp.eq.s32.totalorder %s29, 1
      %p341 = por %p339, %p340
      %p342 = scmp.ne.s32.totalorder %s333, %s334
      %p343 = scmp.eq.s32.totalorder %s29, 0
      %p344 = por %p342, %p343
      %p345 = scmp.ne.s32.totalorder %s333, %s334
      %p346 = scmp.eq.s32.totalorder %s30, 1
      %p347 = por %p345, %p346
      %p349 = scmp.ne.s32.totalorder %s334, %s348
      %p350 = scmp.eq.s32.totalorder %s30, 0
      %p351 = por %p349, %p350
      %s353 = sadd.s32 %s352, 1
      %p356 = scmp.eq.s32.totalorder %s24, 1
      %p357 = scmp.ne.s32.totalorder %s352, %s354
      %p358 = scmp.eq.s32.totalorder %s24, 0
      %p359 = por %p357, %p358
      %p360 = scmp.ne.s32.totalorder %s352, %s354
      %p361 = scmp.eq.s32.totalorder %s29, 1
      %p362 = por %p360, %p361
      %p363 = scmp.ne.s32.totalorder %s354, %s355
      %p364 = scmp.eq.s32.totalorder %s29, 0
      %p365 = por %p363, %p364
      %p366 = scmp.ne.s32.totalorder %s354, %s355
      %p367 = scmp.eq.s32.totalorder %s30, 1
      %p368 = por %p366, %p367
      %p370 = scmp.ne.s32.totalorder %s355, %s369
      %p371 = scmp.eq.s32.totalorder %s30, 0
      %p372 = por %p370, %p371
      %s373 = ssub.s32 %s24, %s31
      %p374 = scmp.eq.s32.totalorder %s373, 0
      %s376 = sadd.s32 %s375, 1
      %s377 = scalar_select %p374, %s375, %s376
      %p380 = pneg %p374
      %p381 = scmp.eq.s32.totalorder %s24, 1
      %p382 = por %p380, %p381
      %p383 = scmp.ne.s32.totalorder %s375, %s378
      %p384 = scmp.eq.s32.totalorder %s24, 0
      %p385 = por %p383, %p384
      %p386 = scmp.ne.s32.totalorder %s375, %s378
      %p387 = scmp.eq.s32.totalorder %s29, 1
      %p388 = por %p386, %p387
      %p389 = scmp.ne.s32.totalorder %s378, %s379
      %p390 = scmp.eq.s32.totalorder %s29, 0
      %p391 = por %p389, %p390
      %p392 = scmp.ne.s32.totalorder %s378, %s379
      %p393 = scmp.eq.s32.totalorder %s30, 1
      %p394 = por %p392, %p393
      %p396 = scmp.ne.s32.totalorder %s379, %s395
      %p397 = scmp.eq.s32.totalorder %s30, 0
      %p398 = por %p396, %p397
      %p399 = scmp.le.s32.totalorder 1, %s24
      %p400 = scmp.lt.s32.totalorder %s24, 3
      %p401 = pnand %p399, %p400
      %p402 = pneg %p401
      // Predicated region
      $region9: #{_lambda_.2} parent=5 // pred_check
        _
      $region10: #{_lambda_.2} parent=5 // pred_check_branch
        %404 = sbr.rel (%p401) target = $region12
      $region11: #{_lambda_.2} parent=5 // pred_region
        %s405 = ssub.s32 %s24, 1
        // Predicated region
        $region13: #{_lambda_.2} parent=11 // pred_check
          %p406 = pneg %p71
        $region14: #{_lambda_.2} parent=11 // pred_check_branch
          %408 = sbr.rel (%p406) target = $region16
        $region15: #{_lambda_.2} parent=11 // pred_region
          _
        $region16: #{_lambda_.2} parent=11 // pred_fallthru
          _
        // Predicated region
        $region17: #{_lambda_.2} parent=11 // pred_check
          %p409 = pneg %p92
        $region18: #{_lambda_.2} parent=11 // pred_check_branch
          %411 = sbr.rel (%p409) target = $region20
        $region19: #{_lambda_.2} parent=11 // pred_region
          _
        $region20: #{_lambda_.2} parent=11 // pred_fallthru
          _
        // Predicated region
        $region21: #{_lambda_.2} parent=11 // pred_check
          %p412 = pneg %p113
        $region22: #{_lambda_.2} parent=11 // pred_check_branch
          %414 = sbr.rel (%p412) target = $region24
        $region23: #{_lambda_.2} parent=11 // pred_region
          _
        $region24: #{_lambda_.2} parent=11 // pred_fallthru
          _
        // Predicated region
        $region25: #{_lambda_.2} parent=11 // pred_check
          %p415 = pneg %p134
        $region26: #{_lambda_.2} parent=11 // pred_check_branch
          %417 = sbr.rel (%p415) target = $region28
        $region27: #{_lambda_.2} parent=11 // pred_region
          %419 = vsyncadd [#allocation3], 0
          %s420 = sshll.u32 %s4, 4
          %s421 = int_to_ptr.hbm [resolvable:$true] %s420
          %s422 = sshll.u32 [#allocation2], 4
          %s423 = int_to_ptr.vmem [resolvable:$true] %s422
          %428 = dma.hbm_to_vmem [thread:$0]  %s421, 512, %s423, [#allocation3], 128, 128, 8
        $region28: #{_lambda_.2} parent=11 // pred_fallthru
          _
        // Predicated region
        $region29: #{_lambda_.2} parent=11 // pred_check
          %p429 = pneg %p155
        $region30: #{_lambda_.2} parent=11 // pred_check_branch
          %431 = sbr.rel (%p429) target = $region32
        $region31: #{_lambda_.2} parent=11 // pred_region
          _
        $region32: #{_lambda_.2} parent=11 // pred_fallthru
          _
        // Predicated region
        $region33: #{_lambda_.2} parent=11 // pred_check
          %p432 = pneg %p176
        $region34: #{_lambda_.2} parent=11 // pred_check_branch
          %434 = sbr.rel (%p432) target = $region36
        $region35: #{_lambda_.2} parent=11 // pred_region
          _
        $region36: #{_lambda_.2} parent=11 // pred_fallthru
          _
        // Predicated region
        $region37: #{_lambda_.2} parent=11 // pred_check
          %p435 = pneg %p197
        $region38: #{_lambda_.2} parent=11 // pred_check_branch
          %437 = sbr.rel (%p435) target = $region40
        $region39: #{_lambda_.2} parent=11 // pred_region
          _
        $region40: #{_lambda_.2} parent=11 // pred_fallthru
          _
        // Predicated region
        $region41: #{_lambda_.2} parent=11 // pred_check
          %p438 = pneg %p218
        $region42: #{_lambda_.2} parent=11 // pred_check_branch
          %440 = sbr.rel (%p438) target = $region44
        $region43: #{_lambda_.2} parent=11 // pred_region
          %442 = vsyncadd [#allocation5], 0
          %s443 = sshll.u32 %s8, 4
          %s444 = int_to_ptr.hbm [resolvable:$true] %s443
          %s445 = sshll.u32 [#allocation4], 4
          %s446 = int_to_ptr.vmem [resolvable:$true] %s445
          %451 = dma.hbm_to_vmem [thread:$0]  %s444, 512, %s446, [#allocation5], 128, 128, 8
        $region44: #{_lambda_.2} parent=11 // pred_fallthru
          _
        // Predicated region
        $region45: #{_lambda_.2} parent=11 // pred_check
          %p452 = pneg %p239
        $region46: #{_lambda_.2} parent=11 // pred_check_branch
          %454 = sbr.rel (%p452) target = $region48
        $region47: #{_lambda_.2} parent=11 // pred_region
          _
        $region48: #{_lambda_.2} parent=11 // pred_fallthru
          _
        // Predicated region
        $region49: #{_lambda_.2} parent=11 // pred_check
          %p455 = pneg %p260
        $region50: #{_lambda_.2} parent=11 // pred_check_branch
          %457 = sbr.rel (%p455) target = $region52
        $region51: #{_lambda_.2} parent=11 // pred_region
          _
        $region52: #{_lambda_.2} parent=11 // pred_fallthru
          _
        // Predicated region
        $region53: #{_lambda_.2} parent=11 // pred_check
          %p458 = pneg %p281
        $region54: #{_lambda_.2} parent=11 // pred_check_branch
          %460 = sbr.rel (%p458) target = $region56
        $region55: #{_lambda_.2} parent=11 // pred_region
          _
        $region56: #{_lambda_.2} parent=11 // pred_fallthru
          _
        // Predicated region
        $region57: #{_lambda_.2} parent=11 // pred_check
          %p461 = pneg %p302
        $region58: #{_lambda_.2} parent=11 // pred_check_branch
          %463 = sbr.rel (%p461) target = $region60
        $region59: #{_lambda_.2} parent=11 // pred_region
          _
        $region60: #{_lambda_.2} parent=11 // pred_fallthru
          _
        // Predicated region
        $region61: #{_lambda_.2} parent=11 // pred_check
          %p464 = pneg %p323
        $region62: #{_lambda_.2} parent=11 // pred_check_branch
          %466 = sbr.rel (%p464) target = $region64
        $region63: #{_lambda_.2} parent=11 // pred_region
          _
        $region64: #{_lambda_.2} parent=11 // pred_fallthru
          _
        // Predicated region
        $region65: #{_lambda_.2} parent=11 // pred_check
          %p467 = pneg %p344
        $region66: #{_lambda_.2} parent=11 // pred_check_branch
          %469 = sbr.rel (%p467) target = $region68
        $region67: #{_lambda_.2} parent=11 // pred_region
          _
        $region68: #{_lambda_.2} parent=11 // pred_fallthru
          _
        // Predicated region
        $region69: #{_lambda_.2} parent=11 // pred_check
          %p470 = pneg %p365
        $region70: #{_lambda_.2} parent=11 // pred_check_branch
          %472 = sbr.rel (%p470) target = $region72
        $region71: #{_lambda_.2} parent=11 // pred_region
          _
        $region72: #{_lambda_.2} parent=11 // pred_fallthru
          _
      $region12: #{_lambda_.2} parent=5 // pred_fallthru
        _
      %p473 = scmp.lt.s32.totalorder %s24, 2
      // Predicated region
      $region73: #{_lambda_.2} parent=5 // pred_check
        %p474 = pneg %p473
      $region74: #{_lambda_.2} parent=5 // pred_check_branch
        %476 = sbr.rel (%p474) target = $region76
      $region75: #{_lambda_.2} parent=5 // pred_region
        // Predicated region
        $region77: #{_lambda_.2} parent=75 // pred_check
          %p477 = pneg %p44
        $region78: #{_lambda_.2} parent=75 // pred_check_branch
          %479 = sbr.rel (%p477) target = $region80
        $region79: #{_lambda_.2} parent=75 // pred_region
          %p480 = scmp.lt.s32.totalorder %s24, 1
          %s481 = scalar_select %p480, %s24, 1
          %s482 = smul.addr %s481, 2
          %s483 = smul.addr %s482, 8
          %s484 = scalar_lea.vmem %s0, %s483
        $region80: #{_lambda_.2} parent=75 // pred_fallthru
          _
      $region76: #{_lambda_.2} parent=5 // pred_fallthru
        _
      %p485 = scmp.le.s32.totalorder 1, %s24
      %p486 = scmp.lt.s32.totalorder %s24, 3
      %p487 = pnand %p485, %p486
      %p488 = pneg %p487
      // Predicated region
      $region81: #{_lambda_.2} parent=5 // pred_check
        _
      $region82: #{_lambda_.2} parent=5 // pred_check_branch
        %490 = sbr.rel (%p487) target = $region84
      $region83: #{_lambda_.2} parent=5 // pred_region
        %s491 = ssub.s32 %s24, 1
        // Predicated region
        $region85: #{_lambda_.2} parent=83 // pred_check
          %p492 = pneg %p134
        $region86: #{_lambda_.2} parent=83 // pred_check_branch
          %494 = sbr.rel (%p492) target = $region88
        $region87: #{_lambda_.2} parent=83 // pred_region
          %496 = dma.done [#allocation3], 512
        $region88: #{_lambda_.2} parent=83 // pred_fallthru
          _
        // Predicated region
        $region89: #{_lambda_.2} parent=83 // pred_check
          %p497 = pneg %p218
        $region90: #{_lambda_.2} parent=83 // pred_check_branch
          %499 = sbr.rel (%p497) target = $region92
        $region91: #{_lambda_.2} parent=83 // pred_region
          %501 = dma.done [#allocation5], 512
        $region92: #{_lambda_.2} parent=83 // pred_fallthru
          _
        %p502 = scmp.lt.s32.totalorder %s29, 1
        %s503 = scalar_select %p502, %s29, 1
        %s504 = smul.addr %s503, 2
        %s505 = smul.addr %s504, 8
        %s506 = scalar_lea.vmem %s0, %s505
        %p507 = pneg %p50
        %p508 = pneg %p47
        %p509 = pneg %p71
        %p510 = pneg %p68
        %p511 = pneg %p92
        %p512 = pneg %p89
        %p513 = pneg %p113
        %p514 = pneg %p110
        %p515 = pneg %p134
        %p516 = pneg %p131
        %p517 = pneg %p155
        %p518 = pneg %p152
        %p519 = pneg %p176
        %p520 = pneg %p173
        %p521 = pneg %p197
        %p522 = pneg %p194
        %p523 = pneg %p218
        %p524 = pneg %p215
        %p525 = pneg %p239
        %p526 = pneg %p236
        %p527 = pneg %p260
        %p528 = pneg %p257
        %p529 = pneg %p281
        %p530 = pneg %p278
        %p531 = pneg %p302
        %p532 = pneg %p299
        %p533 = pneg %p323
        %p534 = pneg %p320
        %p535 = pneg %p344
        %p536 = pneg %p341
        %p537 = pneg %p365
        %p538 = pneg %p362
        %p539 = pneg %p391
        %p540 = pneg %p388
        %p541 = scmp.lt.s32.totalorder %s29, 1
        %s542 = scalar_select %p541, %s29, 1
        %s543 = smul.addr %s542, 2
        %s544 = smul.addr %s543, 8
        %s545 = scalar_lea.vmem %s16, %s544
        %p546 = scmp.lt.s32.totalorder %s29, 1
        %s547 = scalar_select %p546, %s29, 1
        %s548 = smul.addr %s547, 2
        %s549 = smul.addr %s548, 8
        %s550 = scalar_lea.vmem %s0, %s549
        %p551 = scmp.lt.s32.totalorder %s29, 1
        %s552 = scalar_select %p551, %s29, 1
        %s553 = smul.addr %s552, 2
        %s554 = smul.addr %s553, 8
        %s555 = scalar_lea.vmem %s16, %s554
        %v556 = vld [vmem:[%s550] sm:$0xff]
        %v557 = vld [vmem:[%s550 + $0x8] sm:$0xff]
        %v558 = vld [vmem:[%s1] sm:$0xff]
        %v559 = vld [vmem:[%s1 + $0x8] sm:$0xff]
        %v560 = vadd.f32 %v556, %v558
        %v561 = vadd.f32 %v557, %v559
        %v562 = vld [vmem:[%s2] sm:$0xff]
        %v563 = vld [vmem:[%s2 + $0x8] sm:$0xff]
        %v564 = vld [vmem:[%s2 + $0x10] sm:$0xff]
        %v565 = vld [vmem:[%s2 + $0x18] sm:$0xff]
        %v566 = vld [vmem:[%s3] sm:$0x1]
        %v568 = vperm.slane %v566, 0
        %vm570 = vcmask 261120
        %v572 = vsel %vm570, %v560, 0
        %v575 = vsel %vm570, %v561, 0
        %577 = vmatpush.msra.mxu0 0.0
        %578 = vmatpush.msra.mxu0 0.0
        %579 = vmatpush.msra.mxu0 0.0
        %580 = vmatpush.msra.mxu0 0.0
        %581 = vmatpush.msra.mxu0 0.0
        %582 = vmatpush.msra.mxu0 0.0
        %583 = vmatpush.msra.mxu0 0.0
        %584 = vmatpush.msra.mxu0 0.0
        %585 = vmatpush.msra.mxu0 0.0
        %586 = vmatpush.msra.mxu0 0.0
        %587 = vmatpush.msra.mxu0 0.0
        %588 = vmatpush.msra.mxu0 0.0
        %589 = vmatpush.msra.mxu0 %v565
        %590 = vmatpush.msra.mxu0 %v564
        %591 = vmatpush.msra.mxu0 %v563
        %592 = vmatpush.msra.mxu0 %v562
        %593 = vmatmul.f32.gmra.mxu0 %v572
        %v594 = vpop.f32.mrf.mxu0
        %v595 = vadd.f32 %v568, %v594
        %596 = vmatmul.f32.gmra.mxu0 %v575
        %v597 = vpop.f32.mrf.mxu0
        %v598 = vadd.f32 %v568, %v597
        %599 = vdwg.mxu0
        %v600 = vlaneseq
        %v601 = vshrl.u32 %v600, 7
        %v602 = vadd.s32 %v601, 8
        %v603 = vlaneseq
        %v604 = vand.u32 %v603, 127
        %vm605 = vcmp.le.s32.totalorder %v604, %v601
        %vm606 = vcmp.le.s32.totalorder %v604, %v602
        %609 = vrot.lane.b32.xlu0 %v595, 96
        %v610 = vpop.permute.xlu0 %609
        %611 = vrot.lane.b32.xlu0 %v598, 96
        %v612 = vpop.permute.xlu0 %611
        %vm613 = vcmask 130048
        %v614 = vsel %vm613, %v595, 0
        %v616 = vsel %vm613, %v598, 0
        %v618 = vsel %vm613, %v610, 0
        %v620 = vsel %vm613, %v612, 0
        %622 = vmatpush.xpose.msra.mxu0 0.0
        %623 = vmatpush.xpose.msra.mxu0 0.0
        %624 = vmatpush.xpose.msra.mxu0 0.0
        %625 = vmatpush.xpose.msra.mxu0 0.0
        %626 = vmatpush.xpose.msra.mxu0 0.0
        %627 = vmatpush.xpose.msra.mxu0 0.0
        %628 = vmatpush.xpose.msra.mxu0 0.0
        %629 = vmatpush.xpose.msra.mxu0 0.0
        %630 = vmatpush.xpose.msra.mxu0 0.0
        %631 = vmatpush.xpose.msra.mxu0 0.0
        %632 = vmatpush.xpose.msra.mxu0 0.0
        %633 = vmatpush.xpose.msra.mxu0 0.0
        %634 = vmatpush.xpose.msra.mxu0 0.0
        %635 = vmatpush.xpose.msra.mxu0 0.0
        %636 = vmatpush.xpose.msra.mxu0 %v620
        %637 = vmatpush.xpose.msra.mxu0 %v618
        %638 = vmatmul.f32.gmra.mxu0 %v614
        %v639 = vpop.f32.mrf.mxu0
        %v640 = vadd.f32 0.0, %v639
        %641 = vmatmul.f32.gmra.mxu0 %v616
        %v642 = vpop.f32.mrf.mxu0
        %v643 = vadd.f32 0.0, %v642
        %644 = vdwg.mxu0
        %v645 = vmul.f32 %v640, 0.25
        %v646 = vmul.f32 %v643, 0.25
        %v647 = vsel %vm605, %v645, -1e+30
        %v648 = vsel %vm606, %v646, -1e+30
        %v649 = vsel %vm613, %v647, -inf
        %650 = vmax.xlane.f32.xlu0 %v649
        %v651 = vpop.xlane.xlu0 %650
        %v652 = vsel %vm613, %v648, -inf
        %653 = vmax.xlane.f32.xlu0 %v652
        %v654 = vpop.xlane.xlu0 %653
        %v655 = vsub.f32 %v647, %v651
        %v656 = vsub.f32 %v648, %v654
        %v657 = vmul.f32 %v655, 1.442695
        %v658 = vpow.pop %v657
        %v659 = vmul.f32 %v656, 1.442695
        %v660 = vpow.pop %v659
        %v661 = vsel %vm613, %v658, 0.0
        %662 = vadd.xlane.f32.xlu0 %v661
        %v663 = vpop.xlane.xlu0 %662
        %v664 = vsel %vm613, %v660, 0.0
        %665 = vadd.xlane.f32.xlu0 %v664
        %v666 = vpop.xlane.xlu0 %665
        %667 = vrot.lane.b32.xlu0 %v595, 64
        %v668 = vpop.permute.xlu0 %667
        %669 = vrot.lane.b32.xlu0 %v598, 64
        %v670 = vpop.permute.xlu0 %669
        %v674 = vsel %vm613, %v658, 0
        %v677 = vsel %vm613, %v660, 0
        %679 = vmatpush.msra.mxu0 0.0
        %680 = vmatpush.msra.mxu0 0.0
        %681 = vmatpush.msra.mxu0 0.0
        %682 = vmatpush.msra.mxu0 0.0
        %683 = vmatpush.msra.mxu0 0.0
        %684 = vmatpush.msra.mxu0 0.0
        %685 = vmatpush.msra.mxu0 0.0
        %686 = vmatpush.msra.mxu0 0.0
        %687 = vmatpush.msra.mxu0 0.0
        %688 = vmatpush.msra.mxu0 0.0
        %689 = vmatpush.msra.mxu0 0.0
        %690 = vmatpush.msra.mxu0 0.0
        %691 = vmatpush.msra.mxu0 0.0
        %692 = vmatpush.msra.mxu0 0.0
        %693 = vmatpush.msra.mxu0 %v670
        %694 = vmatpush.msra.mxu0 %v668
        %695 = vmatmul.f32.gmra.mxu0 %v674
        %v696 = vpop.f32.mrf.mxu0
        %v697 = vadd.f32 0.0, %v696
        %698 = vmatmul.f32.gmra.mxu0 %v677
        %v699 = vpop.f32.mrf.mxu0
        %v700 = vadd.f32 0.0, %v699
        %701 = vdwg.mxu0
        %v702 = vrcp.pop %v663
        %v703 = vrcp.pop %v666
        %v704 = vmul.f32 %v697, %v702
        %v705 = vmul.f32 %v700, %v703
        %706 = vrot.lane.b32.xlu0 %v595, 112
        %v707 = vpop.permute.xlu0 %706
        %708 = vrot.lane.b32.xlu0 %v598, 112
        %v709 = vpop.permute.xlu0 %708
        %710 = vrot.lane.b32.xlu0 %v595, 80
        %v711 = vpop.permute.xlu0 %710
        %712 = vrot.lane.b32.xlu0 %v598, 80
        %v713 = vpop.permute.xlu0 %712
        %v714 = vsel %vm613, %v707, 0
        %v716 = vsel %vm613, %v709, 0
        %v718 = vsel %vm613, %v711, 0
        %v720 = vsel %vm613, %v713, 0
        %722 = vmatpush.xpose.msra.mxu0 0.0
        %723 = vmatpush.xpose.msra.mxu0 0.0
        %724 = vmatpush.xpose.msra.mxu0 0.0
        %725 = vmatpush.xpose.msra.mxu0 0.0
        %726 = vmatpush.xpose.msra.mxu0 0.0
        %727 = vmatpush.xpose.msra.mxu0 0.0
        %728 = vmatpush.xpose.msra.mxu0 0.0
        %729 = vmatpush.xpose.msra.mxu0 0.0
        %730 = vmatpush.xpose.msra.mxu0 0.0
        %731 = vmatpush.xpose.msra.mxu0 0.0
        %732 = vmatpush.xpose.msra.mxu0 0.0
        %733 = vmatpush.xpose.msra.mxu0 0.0
        %734 = vmatpush.xpose.msra.mxu0 0.0
        %735 = vmatpush.xpose.msra.mxu0 0.0
        %736 = vmatpush.xpose.msra.mxu0 %v720
        %737 = vmatpush.xpose.msra.mxu0 %v718
        %738 = vmatmul.f32.gmra.mxu0 %v714
        %v739 = vpop.f32.mrf.mxu0
        %v740 = vadd.f32 0.0, %v739
        %741 = vmatmul.f32.gmra.mxu0 %v716
        %v742 = vpop.f32.mrf.mxu0
        %v743 = vadd.f32 0.0, %v742
        %744 = vdwg.mxu0
        %v745 = vmul.f32 %v740, 0.25
        %v746 = vmul.f32 %v743, 0.25
        %v747 = vsel %vm605, %v745, -1e+30
        %v748 = vsel %vm606, %v746, -1e+30
        %v749 = vsel %vm613, %v747, -inf
        %750 = vmax.xlane.f32.xlu0 %v749
        %v751 = vpop.xlane.xlu0 %750
        %v752 = vsel %vm613, %v748, -inf
        %753 = vmax.xlane.f32.xlu0 %v752
        %v754 = vpop.xlane.xlu0 %753
        %v755 = vsub.f32 %v747, %v751
        %v756 = vsub.f32 %v748, %v754
        %v757 = vmul.f32 %v755, 1.442695
        %v758 = vpow.pop %v757
        %v759 = vmul.f32 %v756, 1.442695
        %v760 = vpow.pop %v759
        %v761 = vsel %vm613, %v758, 0.0
        %762 = vadd.xlane.f32.xlu0 %v761
        %v763 = vpop.xlane.xlu0 %762
        %v764 = vsel %vm613, %v760, 0.0
        %765 = vadd.xlane.f32.xlu0 %v764
        %v766 = vpop.xlane.xlu0 %765
        %767 = vrot.lane.b32.xlu0 %v595, 48
        %v768 = vpop.permute.xlu0 %767
        %769 = vrot.lane.b32.xlu0 %v598, 48
        %v770 = vpop.permute.xlu0 %769
        %v774 = vsel %vm613, %v758, 0
        %v777 = vsel %vm613, %v760, 0
        %779 = vmatpush.msra.mxu0 0.0
        %780 = vmatpush.msra.mxu0 0.0
        %781 = vmatpush.msra.mxu0 0.0
        %782 = vmatpush.msra.mxu0 0.0
        %783 = vmatpush.msra.mxu0 0.0
        %784 = vmatpush.msra.mxu0 0.0
        %785 = vmatpush.msra.mxu0 0.0
        %786 = vmatpush.msra.mxu0 0.0
        %787 = vmatpush.msra.mxu0 0.0
        %788 = vmatpush.msra.mxu0 0.0
        %789 = vmatpush.msra.mxu0 0.0
        %790 = vmatpush.msra.mxu0 0.0
        %791 = vmatpush.msra.mxu0 0.0
        %792 = vmatpush.msra.mxu0 0.0
        %793 = vmatpush.msra.mxu0 %v770
        %794 = vmatpush.msra.mxu0 %v768
        %795 = vmatmul.f32.gmra.mxu0 %v774
        %v796 = vpop.f32.mrf.mxu0
        %v797 = vadd.f32 0.0, %v796
        %798 = vmatmul.f32.gmra.mxu0 %v777
        %v799 = vpop.f32.mrf.mxu0
        %v800 = vadd.f32 0.0, %v799
        %801 = vdwg.mxu0
        %v802 = vrcp.pop %v763
        %v803 = vrcp.pop %v766
        %v804 = vmul.f32 %v797, %v802
        %v805 = vmul.f32 %v800, %v803
        %808 = vrot.lane.b32.xlu0 %v804, 16
        %v809 = vpop.permute.xlu0 %808
        %810 = vrot.lane.b32.xlu0 %v805, 16
        %v811 = vpop.permute.xlu0 %810
        %v814 = vsel %vm613, %v704, %v809
        %v815 = vsel %vm613, %v705, %v811
        %v816 = vld [vmem:[#allocation2] sm:$0xff]
        %v817 = vld [vmem:[#allocation2 + $0x8] sm:$0xff]
        %v818 = vld [vmem:[#allocation2 + $0x10] sm:$0xff]
        %v819 = vld [vmem:[#allocation2 + $0x18] sm:$0xff]
        %v820 = vld [vmem:[%s5] sm:$0x1]
        %v822 = vperm.slane %v820, 0
        %v825 = vsel %vm570, %v814, 0
        %v828 = vsel %vm570, %v815, 0
        %830 = vmatpush.msra.mxu0 0.0
        %831 = vmatpush.msra.mxu0 0.0
        %832 = vmatpush.msra.mxu0 0.0
        %833 = vmatpush.msra.mxu0 0.0
        %834 = vmatpush.msra.mxu0 0.0
        %835 = vmatpush.msra.mxu0 0.0
        %836 = vmatpush.msra.mxu0 0.0
        %837 = vmatpush.msra.mxu0 0.0
        %838 = vmatpush.msra.mxu0 0.0
        %839 = vmatpush.msra.mxu0 0.0
        %840 = vmatpush.msra.mxu0 0.0
        %841 = vmatpush.msra.mxu0 0.0
        %842 = vmatpush.msra.mxu0 %v819
        %843 = vmatpush.msra.mxu0 %v818
        %844 = vmatpush.msra.mxu0 %v817
        %845 = vmatpush.msra.mxu0 %v816
        %846 = vmatmul.f32.gmra.mxu0 %v825
        %v847 = vpop.f32.mrf.mxu0
        %v848 = vadd.f32 %v822, %v847
        %849 = vmatmul.f32.gmra.mxu0 %v828
        %v850 = vpop.f32.mrf.mxu0
        %v851 = vadd.f32 %v822, %v850
        %852 = vdwg.mxu0
        %v853 = vadd.f32 %v560, %v848
        %v854 = vadd.f32 %v561, %v851
        %v855 = vsel %vm570, %v853, 0.0
        %856 = vadd.xlane.f32.xlu0 %v855
        %v857 = vpop.xlane.xlu0 %856
        %v858 = vsel %vm570, %v854, 0.0
        %859 = vadd.xlane.f32.xlu0 %v858
        %v860 = vpop.xlane.xlu0 %859
        %v861 = vrcp.pop 32.0
        %v862 = vmul.f32 32.0, %v861
        %v863 = vsub.f32 1.0, %v862
        %v864 = vmul.f32 %v861, %v863
        %v865 = vadd.f32 %v861, %v864
        %vm866 = vweird.f32 %v861
        %v867 = vsel %vm866, %v861, %v865
        %v868 = vmul.f32 %v857, %v867
        %v869 = vmul.f32 %v860, %v867
        %v870 = vsub.f32 %v853, %v868
        %v871 = vsub.f32 %v854, %v869
        %v872 = vmul.f32 %v870, %v870
        %v873 = vmul.f32 %v871, %v871
        %v874 = vsel %vm570, %v872, 0.0
        %875 = vadd.xlane.f32.xlu0 %v874
        %v876 = vpop.xlane.xlu0 %875
        %v877 = vsel %vm570, %v873, 0.0
        %878 = vadd.xlane.f32.xlu0 %v877
        %v879 = vpop.xlane.xlu0 %878
        %v880 = vmul.f32 %v876, %v867
        %v881 = vmul.f32 %v879, %v867
        %v882 = vadd.f32 %v880, 1e-05
        %v883 = vadd.f32 %v881, 1e-05
        %v884 = vrsqrt.pop %v882
        %v885 = vmul.f32 %v884, %v882
        %v886 = vmul.f32 %v885, %v884
        %v887 = vmul.f32 0.5, %v886
        %v888 = vsub.f32 1.5, %v887
        %v889 = vmul.f32 %v884, %v888
        %vm890 = vweird.f32 %v882
        %vm891 = vweird.f32 %v884
        %vm892 = vmor %vm890, %vm891
        %v893 = vsel %vm892, %v884, %v889
        %v894 = vrsqrt.pop %v883
        %v895 = vmul.f32 %v894, %v883
        %v896 = vmul.f32 %v895, %v894
        %v897 = vmul.f32 0.5, %v896
        %v898 = vsub.f32 1.5, %v897
        %v899 = vmul.f32 %v894, %v898
        %vm900 = vweird.f32 %v883
        %vm901 = vweird.f32 %v894
        %vm902 = vmor %vm900, %vm901
        %v903 = vsel %vm902, %v894, %v899
        %v904 = vmul.f32 %v870, %v893
        %v905 = vmul.f32 %v871, %v903
        %v906 = vld [vmem:[%s6] sm:$0x1]
        %v908 = vperm.slane %v906, 0
        %v910 = vmul.f32 %v904, %v908
        %v911 = vmul.f32 %v905, %v908
        %v912 = vld [vmem:[%s7] sm:$0x1]
        %v914 = vperm.slane %v912, 0
        %v916 = vadd.f32 %v910, %v914
        %v917 = vadd.f32 %v911, %v914
        %v918 = vld [vmem:[#allocation4] sm:$0xff]
        %v919 = vld [vmem:[#allocation4 + $0x8] sm:$0xff]
        %v920 = vld [vmem:[#allocation4 + $0x10] sm:$0xff]
        %v921 = vld [vmem:[#allocation4 + $0x18] sm:$0xff]
        %v922 = vld [vmem:[%s9] sm:$0x1]
        %v924 = vperm.slane %v922, 0
        %v927 = vsel %vm570, %v916, 0
        %v930 = vsel %vm570, %v917, 0
        %932 = vmatpush.msra.mxu0 0.0
        %933 = vmatpush.msra.mxu0 0.0
        %934 = vmatpush.msra.mxu0 0.0
        %935 = vmatpush.msra.mxu0 0.0
        %936 = vmatpush.msra.mxu0 0.0
        %937 = vmatpush.msra.mxu0 0.0
        %938 = vmatpush.msra.mxu0 0.0
        %939 = vmatpush.msra.mxu0 0.0
        %940 = vmatpush.msra.mxu0 0.0
        %941 = vmatpush.msra.mxu0 0.0
        %942 = vmatpush.msra.mxu0 0.0
        %943 = vmatpush.msra.mxu0 0.0
        %944 = vmatpush.msra.mxu0 %v921
        %945 = vmatpush.msra.mxu0 %v920
        %946 = vmatpush.msra.mxu0 %v919
        %947 = vmatpush.msra.mxu0 %v918
        %948 = vmatmul.f32.gmra.mxu0 %v927
        %v949 = vpop.f32.mrf.mxu0
        %v950 = vadd.f32 %v924, %v949
        %951 = vmatmul.f32.gmra.mxu0 %v930
        %v952 = vpop.f32.mrf.mxu0
        %v953 = vadd.f32 %v924, %v952
        %954 = vdwg.mxu0
        %v955 = vmax.f32 %v950, 0.0
        %v956 = vmax.f32 %v953, 0.0
        %v957 = vld [vmem:[%s10] sm:$0xff]
        %v958 = vld [vmem:[%s10 + $0x8] sm:$0xff]
        %v959 = vld [vmem:[%s10 + $0x10] sm:$0xff]
        %v960 = vld [vmem:[%s10 + $0x18] sm:$0xff]
        %v961 = vld [vmem:[%s10 + $0x20] sm:$0xff]
        %v962 = vld [vmem:[%s10 + $0x28] sm:$0xff]
        %v963 = vld [vmem:[%s10 + $0x30] sm:$0xff]
        %v964 = vld [vmem:[%s10 + $0x38] sm:$0xff]
        %v965 = vld [vmem:[%s11] sm:$0x1]
        %v967 = vperm.slane %v965, 0
        %vm969 = vcmask 523264
        %v971 = vsel %vm969, %v955, 0
        %v974 = vsel %vm969, %v956, 0
        %976 = vmatpush.msra.mxu0 0.0
        %977 = vmatpush.msra.mxu0 0.0
        %978 = vmatpush.msra.mxu0 0.0
        %979 = vmatpush.msra.mxu0 0.0
        %980 = vmatpush.msra.mxu0 0.0
        %981 = vmatpush.msra.mxu0 0.0
        %982 = vmatpush.msra.mxu0 0.0
        %983 = vmatpush.msra.mxu0 0.0
        %984 = vmatpush.msra.mxu0 %v964
        %985 = vmatpush.msra.mxu0 %v963
        %986 = vmatpush.msra.mxu0 %v962
        %987 = vmatpush.msra.mxu0 %v961
        %988 = vmatpush.msra.mxu0 %v960
        %989 = vmatpush.msra.mxu0 %v959
        %990 = vmatpush.msra.mxu0 %v958
        %991 = vmatpush.msra.mxu0 %v957
        %992 = vmatmul.f32.gmra.mxu0 %v971
        %v993 = vpop.f32.mrf.mxu0
        %v994 = vadd.f32 %v967, %v993
        %995 = vmatmul.f32.gmra.mxu0 %v974
        %v996 = vpop.f32.mrf.mxu0
        %v997 = vadd.f32 %v967, %v996
        %998 = vdwg.mxu0
        %v999 = vadd.f32 %v916, %v994
        %v1000 = vadd.f32 %v917, %v997
        %v1001 = vsel %vm570, %v999, 0.0
        %1002 = vadd.xlane.f32.xlu0 %v1001
        %v1003 = vpop.xlane.xlu0 %1002
        %v1004 = vsel %vm570, %v1000, 0.0
        %1005 = vadd.xlane.f32.xlu0 %v1004
        %v1006 = vpop.xlane.xlu0 %1005
        %v1007 = vmul.f32 %v1003, %v867
        %v1008 = vmul.f32 %v1006, %v867
        %v1009 = vsub.f32 %v999, %v1007
        %v1010 = vsub.f32 %v1000, %v1008
        %v1011 = vmul.f32 %v1009, %v1009
        %v1012 = vmul.f32 %v1010, %v1010
        %v1013 = vsel %vm570, %v1011, 0.0
        %1014 = vadd.xlane.f32.xlu0 %v1013
        %v1015 = vpop.xlane.xlu0 %1014
        %v1016 = vsel %vm570, %v1012, 0.0
        %1017 = vadd.xlane.f32.xlu0 %v1016
        %v1018 = vpop.xlane.xlu0 %1017
        %v1019 = vmul.f32 %v1015, %v867
        %v1020 = vmul.f32 %v1018, %v867
        %v1021 = vadd.f32 %v1019, 1e-05
        %v1022 = vadd.f32 %v1020, 1e-05
        %v1023 = vrsqrt.pop %v1021
        %v1024 = vmul.f32 %v1023, %v1021
        %v1025 = vmul.f32 %v1024, %v1023
        %v1026 = vmul.f32 0.5, %v1025
        %v1027 = vsub.f32 1.5, %v1026
        %v1028 = vmul.f32 %v1023, %v1027
        %vm1029 = vweird.f32 %v1021
        %vm1030 = vweird.f32 %v1023
        %vm1031 = vmor %vm1029, %vm1030
        %v1032 = vsel %vm1031, %v1023, %v1028
        %v1033 = vrsqrt.pop %v1022
        %v1034 = vmul.f32 %v1033, %v1022
        %v1035 = vmul.f32 %v1034, %v1033
        %v1036 = vmul.f32 0.5, %v1035
        %v1037 = vsub.f32 1.5, %v1036
        %v1038 = vmul.f32 %v1033, %v1037
        %vm1039 = vweird.f32 %v1022
        %vm1040 = vweird.f32 %v1033
        %vm1041 = vmor %vm1039, %vm1040
        %v1042 = vsel %vm1041, %v1033, %v1038
        %v1043 = vmul.f32 %v1009, %v1032
        %v1044 = vmul.f32 %v1010, %v1042
        %v1045 = vld [vmem:[%s12] sm:$0x1]
        %v1047 = vperm.slane %v1045, 0
        %v1049 = vmul.f32 %v1043, %v1047
        %v1050 = vmul.f32 %v1044, %v1047
        %v1051 = vld [vmem:[%s13] sm:$0x1]
        %v1053 = vperm.slane %v1051, 0
        %v1055 = vadd.f32 %v1049, %v1053
        %v1056 = vadd.f32 %v1050, %v1053
        %1057 = vst.msk [vmem:[%s555] sm:$0xff] %vm570, %v1055
        %1058 = vst.msk [vmem:[%s555 + $0x8] sm:$0xff] %vm570, %v1056
        %p1059 = scmp.lt.s32.totalorder %s29, 1
        %s1060 = scalar_select %p1059, %s29, 1
        %s1061 = smul.addr %s1060, 2
        %s1062 = smul.addr %s1061, 8
        %s1063 = scalar_lea.vmem %s16, %s1062
        // Predicated region
        $region93: #{_lambda_.2} parent=83 // pred_check
          %p1064 = pneg %p388
        $region94: #{_lambda_.2} parent=83 // pred_check_branch
          %1066 = sbr.rel (%p1064) target = $region96
        $region95: #{_lambda_.2} parent=83 // pred_region
          _
        $region96: #{_lambda_.2} parent=83 // pred_fallthru
          _
      $region84: #{_lambda_.2} parent=5 // pred_fallthru
        _
      %p1067 = scmp.le.s32.totalorder 2, %s24
      // Predicated region
      $region97: #{_lambda_.2} parent=5 // pred_check
        %p1068 = pneg %p1067
      $region98: #{_lambda_.2} parent=5 // pred_check_branch
        %1070 = sbr.rel (%p1068) target = $region100
      $region99: #{_lambda_.2} parent=5 // pred_region
        %s1071 = ssub.s32 %s24, 2
        // Predicated region
        $region101: #{_lambda_.2} parent=99 // pred_check
          %p1072 = pneg %p394
        $region102: #{_lambda_.2} parent=99 // pred_check_branch
          %1074 = sbr.rel (%p1072) target = $region104
        $region103: #{_lambda_.2} parent=99 // pred_region
          %p1075 = scmp.lt.s32.totalorder %s30, 1
          %s1076 = scalar_select %p1075, %s30, 1
          %s1077 = smul.addr %s1076, 2
          %s1078 = smul.addr %s1077, 8
          %s1079 = scalar_lea.vmem %s16, %s1078
        $region104: #{_lambda_.2} parent=99 // pred_fallthru
          _
      $region100: #{_lambda_.2} parent=5 // pred_fallthru
        _
    $region6: #{_lambda_.2} parent=1 // loop_footer
      %s28 = sadd.s32 1, %s24
    $region7: #{_lambda_.2} parent=1 // loop_footer_branch
      %23 = sbr.rel target = $region3
    $region8: #{_lambda_.2} parent=1 // loop_exit
      _
    %1080 = vsyncpa [#allocation3], 1
    %s1081 = scalar_lea.sflag [#allocation3], 1
    %1082 = vsyncpa %s1081, 1
    %1083 = vsyncpa [#allocation5], 1

// kernel: _lambda_.3
$region0: #{_lambda_.3}
  #allocation0 [shape = 'u32[]', space=smem, size = 0x4, offset = 0x4, fixed_abs, tag = 'smem constant byte address 0x4 - core index']
  #allocation1 [shape = 'u32[72,128]{1,0:T(1,128)}', space=vmem, size = 0x9000, scoped, tag = 'internal scratch']
  %s0 = inlined_call_operand.vmem [shape: f32[2,16,32], index: 0, kind: input, shape index: {}]
  %s1 = inlined_call_operand.vmem [shape: f32[16,32], index: 1, kind: input, shape index: {}]
  %s2 = inlined_call_operand.vmem [shape: f32[32,96], index: 2, kind: input, shape index: {}]
  %s3 = inlined_call_operand.vmem [shape: f32[1,96], index: 3, kind: input, shape index: {}]
  %s4 = inlined_call_operand.vmem [shape: f32[32,32], index: 4, kind: input, shape index: {}]
  %s5 = inlined_call_operand.vmem [shape: f32[1,32], index: 5, kind: input, shape index: {}]
  %s6 = inlined_call_operand.vmem [shape: f32[1,32], index: 6, kind: input, shape index: {}]
  %s7 = inlined_call_operand.vmem [shape: f32[1,32], index: 7, kind: input, shape index: {}]
  %s8 = inlined_call_operand.vmem [shape: f32[32,64], index: 8, kind: input, shape index: {}]
  %s9 = inlined_call_operand.vmem [shape: f32[1,64], index: 9, kind: input, shape index: {}]
  %s10 = inlined_call_operand.vmem [shape: f32[64,32], index: 10, kind: input, shape index: {}]
  %s11 = inlined_call_operand.vmem [shape: f32[1,32], index: 11, kind: input, shape index: {}]
  %s12 = inlined_call_operand.vmem [shape: f32[1,32], index: 12, kind: input, shape index: {}]
  %s13 = inlined_call_operand.vmem [shape: f32[1,32], index: 13, kind: input, shape index: {}]
  %s14 = inlined_call_operand.vmem [shape: f32[1,32], index: 14, kind: input, shape index: {}]
  %s15 = inlined_call_operand.vmem [shape: f32[1,32], index: 15, kind: input, shape index: {}]
  %s16 = inlined_call_operand.hbm [shape: f32[2,16,32], index: 16, kind: output, shape index: {}]
  %s17 = sld [smem:[#allocation0]]
  $region97: #{_lambda_.3} parent=0
    _
  %s19 = ssub.s32 1, %s17
  %s20 = scalar_select 0, %s19, %s17
  $region1: #{_lambda_.3} parent=0
    #allocation2 [shape = 'u8[16384]{0}', space=vmem, size = 0x4000, scoped, tag = 'output window, operand 0']
    #allocation3 [shape = 's32[2]{0}', space=sflag, size = 0x8, scoped, tag = 'scoped memory for _lambda_.3']
    %21 = vsyncpa [#allocation3], 0
    %s22 = scalar_lea.sflag [#allocation3], 1
    %23 = vsyncpa %s22, 0
    loop: start=0, step=1, limit=4
    $region2: #{_lambda_.3} parent=1 // loop_pre_header
      _
    $region3: #{_lambda_.3} parent=1 // loop_header
      %s25 = sphi 0, %s29
      %p26 = scmp.ge.s32.totalorder %s25, 4
      %s35 = sphi 0, %s37
      %s38 = sphi 0, %s35
      %s39 = sphi 0, %s38
      %s55 = sphi 0, %s39
      %s59 = sphi 0, %s59
      %s61 = sphi 0, %s59
      %s62 = sphi 0, %s61
      %s76 = sphi 0, %s62
      %s80 = sphi 0, %s80
      %s82 = sphi 0, %s80
      %s83 = sphi 0, %s82
      %s97 = sphi 0, %s83
      %s101 = sphi 0, %s101
      %s103 = sphi 0, %s101
      %s104 = sphi 0, %s103
      %s118 = sphi 0, %s104
      %s122 = sphi 0, %s122
      %s124 = sphi 0, %s122
      %s125 = sphi 0, %s124
      %s139 = sphi 0, %s125
      %s143 = sphi 0, %s143
      %s145 = sphi 0, %s143
      %s146 = sphi 0, %s145
      %s160 = sphi 0, %s146
      %s164 = sphi 0, %s164
      %s166 = sphi 0, %s164
      %s167 = sphi 0, %s166
      %s181 = sphi 0, %s167
      %s185 = sphi 0, %s185
      %s187 = sphi 0, %s185
      %s188 = sphi 0, %s187
      %s202 = sphi 0, %s188
      %s206 = sphi 0, %s206
      %s208 = sphi 0, %s206
      %s209 = sphi 0, %s208
      %s223 = sphi 0, %s209
      %s227 = sphi 0, %s227
      %s229 = sphi 0, %s227
      %s230 = sphi 0, %s229
      %s244 = sphi 0, %s230
      %s248 = sphi 0, %s248
      %s250 = sphi 0, %s248
      %s251 = sphi 0, %s250
      %s265 = sphi 0, %s251
      %s269 = sphi 0, %s269
      %s271 = sphi 0, %s269
      %s272 = sphi 0, %s271
      %s286 = sphi 0, %s272
      %s290 = sphi 0, %s290
      %s292 = sphi 0, %s290
      %s293 = sphi 0, %s292
      %s307 = sphi 0, %s293
      %s311 = sphi 0, %s311
      %s313 = sphi 0, %s311
      %s314 = sphi 0, %s313
      %s328 = sphi 0, %s314
      %s332 = sphi 0, %s332
      %s334 = sphi 0, %s332
      %s335 = sphi 0, %s334
      %s349 = sphi 0, %s335
      %s353 = sphi 0, %s353
      %s355 = sphi 0, %s353
      %s356 = sphi 0, %s355
      %s370 = sphi 0, %s356
      %s376 = sphi 0, %s378
      %s379 = sphi 0, %s376
      %s380 = sphi 0, %s379
      %s396 = sphi 0, %s380
    $region4: #{_lambda_.3} parent=1 // loop_header_branch
      %28 = sbr.rel (%p26) target = $region8
    $region5: #{_lambda_.3} parent=1 // loop_body
      %s30 = ssub.s32 %s25, 1
      %s31 = ssub.s32 %s25, 2
      %s32 = sadd.s32 %s25, 1
      %s33 = ssub.s32 %s25, %s32
      %p34 = scmp.eq.s32.totalorder %s33, 0
      %s36 = sadd.s32 %s35, 1
      %s37 = scalar_select %p34, %s35, %s36
      %p40 = pneg %p34
      %p41 = scmp.eq.s32.totalorder %s25, 1
      %p42 = por %p40, %p41
      %p43 = scmp.ne.s32.totalorder %s35, %s38
      %p44 = scmp.eq.s32.totalorder %s25, 0
      %p45 = por %p43, %p44
      %p46 = scmp.ne.s32.totalorder %s35, %s38
      %p47 = scmp.eq.s32.totalorder %s30, 1
      %p48 = por %p46, %p47
      %p49 = scmp.ne.s32.totalorder %s38, %s39
      %p50 = scmp.eq.s32.totalorder %s30, 0
      %p51 = por %p49, %p50
      %p52 = scmp.ne.s32.totalorder %s38, %s39
      %p53 = scmp.eq.s32.totalorder %s31, 1
      %p54 = por %p52, %p53
      %p56 = scmp.ne.s32.totalorder %s39, %s55
      %p57 = scmp.eq.s32.totalorder %s31, 0
      %p58 = por %p56, %p57
      %s60 = sadd.s32 %s59, 1
      %p63 = scmp.eq.s32.totalorder %s25, 1
      %p64 = scmp.ne.s32.totalorder %s59, %s61
      %p65 = scmp.eq.s32.totalorder %s25, 0
      %p66 = por %p64, %p65
      %p67 = scmp.ne.s32.totalorder %s59, %s61
      %p68 = scmp.eq.s32.totalorder %s30, 1
      %p69 = por %p67, %p68
      %p70 = scmp.ne.s32.totalorder %s61, %s62
      %p71 = scmp.eq.s32.totalorder %s30, 0
      %p72 = por %p70, %p71
      %p73 = scmp.ne.s32.totalorder %s61, %s62
      %p74 = scmp.eq.s32.totalorder %s31, 1
      %p75 = por %p73, %p74
      %p77 = scmp.ne.s32.totalorder %s62, %s76
      %p78 = scmp.eq.s32.totalorder %s31, 0
      %p79 = por %p77, %p78
      %s81 = sadd.s32 %s80, 1
      %p84 = scmp.eq.s32.totalorder %s25, 1
      %p85 = scmp.ne.s32.totalorder %s80, %s82
      %p86 = scmp.eq.s32.totalorder %s25, 0
      %p87 = por %p85, %p86
      %p88 = scmp.ne.s32.totalorder %s80, %s82
      %p89 = scmp.eq.s32.totalorder %s30, 1
      %p90 = por %p88, %p89
      %p91 = scmp.ne.s32.totalorder %s82, %s83
      %p92 = scmp.eq.s32.totalorder %s30, 0
      %p93 = por %p91, %p92
      %p94 = scmp.ne.s32.totalorder %s82, %s83
      %p95 = scmp.eq.s32.totalorder %s31, 1
      %p96 = por %p94, %p95
      %p98 = scmp.ne.s32.totalorder %s83, %s97
      %p99 = scmp.eq.s32.totalorder %s31, 0
      %p100 = por %p98, %p99
      %s102 = sadd.s32 %s101, 1
      %p105 = scmp.eq.s32.totalorder %s25, 1
      %p106 = scmp.ne.s32.totalorder %s101, %s103
      %p107 = scmp.eq.s32.totalorder %s25, 0
      %p108 = por %p106, %p107
      %p109 = scmp.ne.s32.totalorder %s101, %s103
      %p110 = scmp.eq.s32.totalorder %s30, 1
      %p111 = por %p109, %p110
      %p112 = scmp.ne.s32.totalorder %s103, %s104
      %p113 = scmp.eq.s32.totalorder %s30, 0
      %p114 = por %p112, %p113
      %p115 = scmp.ne.s32.totalorder %s103, %s104
      %p116 = scmp.eq.s32.totalorder %s31, 1
      %p117 = por %p115, %p116
      %p119 = scmp.ne.s32.totalorder %s104, %s118
      %p120 = scmp.eq.s32.totalorder %s31, 0
      %p121 = por %p119, %p120
      %s123 = sadd.s32 %s122, 1
      %p126 = scmp.eq.s32.totalorder %s25, 1
      %p127 = scmp.ne.s32.totalorder %s122, %s124
      %p128 = scmp.eq.s32.totalorder %s25, 0
      %p129 = por %p127, %p128
      %p130 = scmp.ne.s32.totalorder %s122, %s124
      %p131 = scmp.eq.s32.totalorder %s30, 1
      %p132 = por %p130, %p131
      %p133 = scmp.ne.s32.totalorder %s124, %s125
      %p134 = scmp.eq.s32.totalorder %s30, 0
      %p135 = por %p133, %p134
      %p136 = scmp.ne.s32.totalorder %s124, %s125
      %p137 = scmp.eq.s32.totalorder %s31, 1
      %p138 = por %p136, %p137
      %p140 = scmp.ne.s32.totalorder %s125, %s139
      %p141 = scmp.eq.s32.totalorder %s31, 0
      %p142 = por %p140, %p141
      %s144 = sadd.s32 %s143, 1
      %p147 = scmp.eq.s32.totalorder %s25, 1
      %p148 = scmp.ne.s32.totalorder %s143, %s145
      %p149 = scmp.eq.s32.totalorder %s25, 0
      %p150 = por %p148, %p149
      %p151 = scmp.ne.s32.totalorder %s143, %s145
      %p152 = scmp.eq.s32.totalorder %s30, 1
      %p153 = por %p151, %p152
      %p154 = scmp.ne.s32.totalorder %s145, %s146
      %p155 = scmp.eq.s32.totalorder %s30, 0
      %p156 = por %p154, %p155
      %p157 = scmp.ne.s32.totalorder %s145, %s146
      %p158 = scmp.eq.s32.totalorder %s31, 1
      %p159 = por %p157, %p158
      %p161 = scmp.ne.s32.totalorder %s146, %s160
      %p162 = scmp.eq.s32.totalorder %s31, 0
      %p163 = por %p161, %p162
      %s165 = sadd.s32 %s164, 1
      %p168 = scmp.eq.s32.totalorder %s25, 1
      %p169 = scmp.ne.s32.totalorder %s164, %s166
      %p170 = scmp.eq.s32.totalorder %s25, 0
      %p171 = por %p169, %p170
      %p172 = scmp.ne.s32.totalorder %s164, %s166
      %p173 = scmp.eq.s32.totalorder %s30, 1
      %p174 = por %p172, %p173
      %p175 = scmp.ne.s32.totalorder %s166, %s167
      %p176 = scmp.eq.s32.totalorder %s30, 0
      %p177 = por %p175, %p176
      %p178 = scmp.ne.s32.totalorder %s166, %s167
      %p179 = scmp.eq.s32.totalorder %s31, 1
      %p180 = por %p178, %p179
      %p182 = scmp.ne.s32.totalorder %s167, %s181
      %p183 = scmp.eq.s32.totalorder %s31, 0
      %p184 = por %p182, %p183
      %s186 = sadd.s32 %s185, 1
      %p189 = scmp.eq.s32.totalorder %s25, 1
      %p190 = scmp.ne.s32.totalorder %s185, %s187
      %p191 = scmp.eq.s32.totalorder %s25, 0
      %p192 = por %p190, %p191
      %p193 = scmp.ne.s32.totalorder %s185, %s187
      %p194 = scmp.eq.s32.totalorder %s30, 1
      %p195 = por %p193, %p194
      %p196 = scmp.ne.s32.totalorder %s187, %s188
      %p197 = scmp.eq.s32.totalorder %s30, 0
      %p198 = por %p196, %p197
      %p199 = scmp.ne.s32.totalorder %s187, %s188
      %p200 = scmp.eq.s32.totalorder %s31, 1
      %p201 = por %p199, %p200
      %p203 = scmp.ne.s32.totalorder %s188, %s202
      %p204 = scmp.eq.s32.totalorder %s31, 0
      %p205 = por %p203, %p204
      %s207 = sadd.s32 %s206, 1
      %p210 = scmp.eq.s32.totalorder %s25, 1
      %p211 = scmp.ne.s32.totalorder %s206, %s208
      %p212 = scmp.eq.s32.totalorder %s25, 0
      %p213 = por %p211, %p212
      %p214 = scmp.ne.s32.totalorder %s206, %s208
      %p215 = scmp.eq.s32.totalorder %s30, 1
      %p216 = por %p214, %p215
      %p217 = scmp.ne.s32.totalorder %s208, %s209
      %p218 = scmp.eq.s32.totalorder %s30, 0
      %p219 = por %p217, %p218
      %p220 = scmp.ne.s32.totalorder %s208, %s209
      %p221 = scmp.eq.s32.totalorder %s31, 1
      %p222 = por %p220, %p221
      %p224 = scmp.ne.s32.totalorder %s209, %s223
      %p225 = scmp.eq.s32.totalorder %s31, 0
      %p226 = por %p224, %p225
      %s228 = sadd.s32 %s227, 1
      %p231 = scmp.eq.s32.totalorder %s25, 1
      %p232 = scmp.ne.s32.totalorder %s227, %s229
      %p233 = scmp.eq.s32.totalorder %s25, 0
      %p234 = por %p232, %p233
      %p235 = scmp.ne.s32.totalorder %s227, %s229
      %p236 = scmp.eq.s32.totalorder %s30, 1
      %p237 = por %p235, %p236
      %p238 = scmp.ne.s32.totalorder %s229, %s230
      %p239 = scmp.eq.s32.totalorder %s30, 0
      %p240 = por %p238, %p239
      %p241 = scmp.ne.s32.totalorder %s229, %s230
      %p242 = scmp.eq.s32.totalorder %s31, 1
      %p243 = por %p241, %p242
      %p245 = scmp.ne.s32.totalorder %s230, %s244
      %p246 = scmp.eq.s32.totalorder %s31, 0
      %p247 = por %p245, %p246
      %s249 = sadd.s32 %s248, 1
      %p252 = scmp.eq.s32.totalorder %s25, 1
      %p253 = scmp.ne.s32.totalorder %s248, %s250
      %p254 = scmp.eq.s32.totalorder %s25, 0
      %p255 = por %p253, %p254
      %p256 = scmp.ne.s32.totalorder %s248, %s250
      %p257 = scmp.eq.s32.totalorder %s30, 1
      %p258 = por %p256, %p257
      %p259 = scmp.ne.s32.totalorder %s250, %s251
      %p260 = scmp.eq.s32.totalorder %s30, 0
      %p261 = por %p259, %p260
      %p262 = scmp.ne.s32.totalorder %s250, %s251
      %p263 = scmp.eq.s32.totalorder %s31, 1
      %p264 = por %p262, %p263
      %p266 = scmp.ne.s32.totalorder %s251, %s265
      %p267 = scmp.eq.s32.totalorder %s31, 0
      %p268 = por %p266, %p267
      %s270 = sadd.s32 %s269, 1
      %p273 = scmp.eq.s32.totalorder %s25, 1
      %p274 = scmp.ne.s32.totalorder %s269, %s271
      %p275 = scmp.eq.s32.totalorder %s25, 0
      %p276 = por %p274, %p275
      %p277 = scmp.ne.s32.totalorder %s269, %s271
      %p278 = scmp.eq.s32.totalorder %s30, 1
      %p279 = por %p277, %p278
      %p280 = scmp.ne.s32.totalorder %s271, %s272
      %p281 = scmp.eq.s32.totalorder %s30, 0
      %p282 = por %p280, %p281
      %p283 = scmp.ne.s32.totalorder %s271, %s272
      %p284 = scmp.eq.s32.totalorder %s31, 1
      %p285 = por %p283, %p284
      %p287 = scmp.ne.s32.totalorder %s272, %s286
      %p288 = scmp.eq.s32.totalorder %s31, 0
      %p289 = por %p287, %p288
      %s291 = sadd.s32 %s290, 1
      %p294 = scmp.eq.s32.totalorder %s25, 1
      %p295 = scmp.ne.s32.totalorder %s290, %s292
      %p296 = scmp.eq.s32.totalorder %s25, 0
      %p297 = por %p295, %p296
      %p298 = scmp.ne.s32.totalorder %s290, %s292
      %p299 = scmp.eq.s32.totalorder %s30, 1
      %p300 = por %p298, %p299
      %p301 = scmp.ne.s32.totalorder %s292, %s293
      %p302 = scmp.eq.s32.totalorder %s30, 0
      %p303 = por %p301, %p302
      %p304 = scmp.ne.s32.totalorder %s292, %s293
      %p305 = scmp.eq.s32.totalorder %s31, 1
      %p306 = por %p304, %p305
      %p308 = scmp.ne.s32.totalorder %s293, %s307
      %p309 = scmp.eq.s32.totalorder %s31, 0
      %p310 = por %p308, %p309
      %s312 = sadd.s32 %s311, 1
      %p315 = scmp.eq.s32.totalorder %s25, 1
      %p316 = scmp.ne.s32.totalorder %s311, %s313
      %p317 = scmp.eq.s32.totalorder %s25, 0
      %p318 = por %p316, %p317
      %p319 = scmp.ne.s32.totalorder %s311, %s313
      %p320 = scmp.eq.s32.totalorder %s30, 1
      %p321 = por %p319, %p320
      %p322 = scmp.ne.s32.totalorder %s313, %s314
      %p323 = scmp.eq.s32.totalorder %s30, 0
      %p324 = por %p322, %p323
      %p325 = scmp.ne.s32.totalorder %s313, %s314
      %p326 = scmp.eq.s32.totalorder %s31, 1
      %p327 = por %p325, %p326
      %p329 = scmp.ne.s32.totalorder %s314, %s328
      %p330 = scmp.eq.s32.totalorder %s31, 0
      %p331 = por %p329, %p330
      %s333 = sadd.s32 %s332, 1
      %p336 = scmp.eq.s32.totalorder %s25, 1
      %p337 = scmp.ne.s32.totalorder %s332, %s334
      %p338 = scmp.eq.s32.totalorder %s25, 0
      %p339 = por %p337, %p338
      %p340 = scmp.ne.s32.totalorder %s332, %s334
      %p341 = scmp.eq.s32.totalorder %s30, 1
      %p342 = por %p340, %p341
      %p343 = scmp.ne.s32.totalorder %s334, %s335
      %p344 = scmp.eq.s32.totalorder %s30, 0
      %p345 = por %p343, %p344
      %p346 = scmp.ne.s32.totalorder %s334, %s335
      %p347 = scmp.eq.s32.totalorder %s31, 1
      %p348 = por %p346, %p347
      %p350 = scmp.ne.s32.totalorder %s335, %s349
      %p351 = scmp.eq.s32.totalorder %s31, 0
      %p352 = por %p350, %p351
      %s354 = sadd.s32 %s353, 1
      %p357 = scmp.eq.s32.totalorder %s25, 1
      %p358 = scmp.ne.s32.totalorder %s353, %s355
      %p359 = scmp.eq.s32.totalorder %s25, 0
      %p360 = por %p358, %p359
      %p361 = scmp.ne.s32.totalorder %s353, %s355
      %p362 = scmp.eq.s32.totalorder %s30, 1
      %p363 = por %p361, %p362
      %p364 = scmp.ne.s32.totalorder %s355, %s356
      %p365 = scmp.eq.s32.totalorder %s30, 0
      %p366 = por %p364, %p365
      %p367 = scmp.ne.s32.totalorder %s355, %s356
      %p368 = scmp.eq.s32.totalorder %s31, 1
      %p369 = por %p367, %p368
      %p371 = scmp.ne.s32.totalorder %s356, %s370
      %p372 = scmp.eq.s32.totalorder %s31, 0
      %p373 = por %p371, %p372
      %s374 = ssub.s32 %s25, %s32
      %p375 = scmp.eq.s32.totalorder %s374, 0
      %s377 = sadd.s32 %s376, 1
      %s378 = scalar_select %p375, %s376, %s377
      %p381 = pneg %p375
      %p382 = scmp.eq.s32.totalorder %s25, 1
      %p383 = por %p381, %p382
      %p384 = scmp.ne.s32.totalorder %s376, %s379
      %p385 = scmp.eq.s32.totalorder %s25, 0
      %p386 = por %p384, %p385
      %p387 = scmp.ne.s32.totalorder %s376, %s379
      %p388 = scmp.eq.s32.totalorder %s30, 1
      %p389 = por %p387, %p388
      %p390 = scmp.ne.s32.totalorder %s379, %s380
      %p391 = scmp.eq.s32.totalorder %s30, 0
      %p392 = por %p390, %p391
      %p393 = scmp.ne.s32.totalorder %s379, %s380
      %p394 = scmp.eq.s32.totalorder %s31, 1
      %p395 = por %p393, %p394
      %p397 = scmp.ne.s32.totalorder %s380, %s396
      %p398 = scmp.eq.s32.totalorder %s31, 0
      %p399 = por %p397, %p398
      %p400 = scmp.le.s32.totalorder 1, %s25
      %p401 = scmp.lt.s32.totalorder %s25, 3
      %p402 = pnand %p400, %p401
      %p403 = pneg %p402
      // Predicated region
      $region9: #{_lambda_.3} parent=5 // pred_check
        _
      $region10: #{_lambda_.3} parent=5 // pred_check_branch
        %405 = sbr.rel (%p402) target = $region12
      $region11: #{_lambda_.3} parent=5 // pred_region
        %s406 = ssub.s32 %s25, 1
        // Predicated region
        $region13: #{_lambda_.3} parent=11 // pred_check
          %p407 = pneg %p72
        $region14: #{_lambda_.3} parent=11 // pred_check_branch
          %409 = sbr.rel (%p407) target = $region16
        $region15: #{_lambda_.3} parent=11 // pred_region
          _
        $region16: #{_lambda_.3} parent=11 // pred_fallthru
          _
        // Predicated region
        $region17: #{_lambda_.3} parent=11 // pred_check
          %p410 = pneg %p93
        $region18: #{_lambda_.3} parent=11 // pred_check_branch
          %412 = sbr.rel (%p410) target = $region20
        $region19: #{_lambda_.3} parent=11 // pred_region
          _
        $region20: #{_lambda_.3} parent=11 // pred_fallthru
          _
        // Predicated region
        $region21: #{_lambda_.3} parent=11 // pred_check
          %p413 = pneg %p114
        $region22: #{_lambda_.3} parent=11 // pred_check_branch
          %415 = sbr.rel (%p413) target = $region24
        $region23: #{_lambda_.3} parent=11 // pred_region
          _
        $region24: #{_lambda_.3} parent=11 // pred_fallthru
          _
        // Predicated region
        $region25: #{_lambda_.3} parent=11 // pred_check
          %p416 = pneg %p135
        $region26: #{_lambda_.3} parent=11 // pred_check_branch
          %418 = sbr.rel (%p416) target = $region28
        $region27: #{_lambda_.3} parent=11 // pred_region
          _
        $region28: #{_lambda_.3} parent=11 // pred_fallthru
          _
        // Predicated region
        $region29: #{_lambda_.3} parent=11 // pred_check
          %p419 = pneg %p156
        $region30: #{_lambda_.3} parent=11 // pred_check_branch
          %421 = sbr.rel (%p419) target = $region32
        $region31: #{_lambda_.3} parent=11 // pred_region
          _
        $region32: #{_lambda_.3} parent=11 // pred_fallthru
          _
        // Predicated region
        $region33: #{_lambda_.3} parent=11 // pred_check
          %p422 = pneg %p177
        $region34: #{_lambda_.3} parent=11 // pred_check_branch
          %424 = sbr.rel (%p422) target = $region36
        $region35: #{_lambda_.3} parent=11 // pred_region
          _
        $region36: #{_lambda_.3} parent=11 // pred_fallthru
          _
        // Predicated region
        $region37: #{_lambda_.3} parent=11 // pred_check
          %p425 = pneg %p198
        $region38: #{_lambda_.3} parent=11 // pred_check_branch
          %427 = sbr.rel (%p425) target = $region40
        $region39: #{_lambda_.3} parent=11 // pred_region
          _
        $region40: #{_lambda_.3} parent=11 // pred_fallthru
          _
        // Predicated region
        $region41: #{_lambda_.3} parent=11 // pred_check
          %p428 = pneg %p219
        $region42: #{_lambda_.3} parent=11 // pred_check_branch
          %430 = sbr.rel (%p428) target = $region44
        $region43: #{_lambda_.3} parent=11 // pred_region
          _
        $region44: #{_lambda_.3} parent=11 // pred_fallthru
          _
        // Predicated region
        $region45: #{_lambda_.3} parent=11 // pred_check
          %p431 = pneg %p240
        $region46: #{_lambda_.3} parent=11 // pred_check_branch
          %433 = sbr.rel (%p431) target = $region48
        $region47: #{_lambda_.3} parent=11 // pred_region
          _
        $region48: #{_lambda_.3} parent=11 // pred_fallthru
          _
        // Predicated region
        $region49: #{_lambda_.3} parent=11 // pred_check
          %p434 = pneg %p261
        $region50: #{_lambda_.3} parent=11 // pred_check_branch
          %436 = sbr.rel (%p434) target = $region52
        $region51: #{_lambda_.3} parent=11 // pred_region
          _
        $region52: #{_lambda_.3} parent=11 // pred_fallthru
          _
        // Predicated region
        $region53: #{_lambda_.3} parent=11 // pred_check
          %p437 = pneg %p282
        $region54: #{_lambda_.3} parent=11 // pred_check_branch
          %439 = sbr.rel (%p437) target = $region56
        $region55: #{_lambda_.3} parent=11 // pred_region
          _
        $region56: #{_lambda_.3} parent=11 // pred_fallthru
          _
        // Predicated region
        $region57: #{_lambda_.3} parent=11 // pred_check
          %p440 = pneg %p303
        $region58: #{_lambda_.3} parent=11 // pred_check_branch
          %442 = sbr.rel (%p440) target = $region60
        $region59: #{_lambda_.3} parent=11 // pred_region
          _
        $region60: #{_lambda_.3} parent=11 // pred_fallthru
          _
        // Predicated region
        $region61: #{_lambda_.3} parent=11 // pred_check
          %p443 = pneg %p324
        $region62: #{_lambda_.3} parent=11 // pred_check_branch
          %445 = sbr.rel (%p443) target = $region64
        $region63: #{_lambda_.3} parent=11 // pred_region
          _
        $region64: #{_lambda_.3} parent=11 // pred_fallthru
          _
        // Predicated region
        $region65: #{_lambda_.3} parent=11 // pred_check
          %p446 = pneg %p345
        $region66: #{_lambda_.3} parent=11 // pred_check_branch
          %448 = sbr.rel (%p446) target = $region68
        $region67: #{_lambda_.3} parent=11 // pred_region
          _
        $region68: #{_lambda_.3} parent=11 // pred_fallthru
          _
        // Predicated region
        $region69: #{_lambda_.3} parent=11 // pred_check
          %p449 = pneg %p366
        $region70: #{_lambda_.3} parent=11 // pred_check_branch
          %451 = sbr.rel (%p449) target = $region72
        $region71: #{_lambda_.3} parent=11 // pred_region
          _
        $region72: #{_lambda_.3} parent=11 // pred_fallthru
          _
      $region12: #{_lambda_.3} parent=5 // pred_fallthru
        _
      %p452 = scmp.lt.s32.totalorder %s25, 2
      // Predicated region
      $region73: #{_lambda_.3} parent=5 // pred_check
        %p453 = pneg %p452
      $region74: #{_lambda_.3} parent=5 // pred_check_branch
        %455 = sbr.rel (%p453) target = $region76
      $region75: #{_lambda_.3} parent=5 // pred_region
        // Predicated region
        $region77: #{_lambda_.3} parent=75 // pred_check
          %p456 = pneg %p45
        $region78: #{_lambda_.3} parent=75 // pred_check_branch
          %458 = sbr.rel (%p456) target = $region80
        $region79: #{_lambda_.3} parent=75 // pred_region
          %p459 = scmp.lt.s32.totalorder %s25, 1
          %s460 = scalar_select %p459, %s25, 1
          %s461 = smul.addr %s460, 2
          %s462 = smul.addr %s461, 8
          %s463 = scalar_lea.vmem %s0, %s462
        $region80: #{_lambda_.3} parent=75 // pred_fallthru
          _
      $region76: #{_lambda_.3} parent=5 // pred_fallthru
        _
      %p464 = scmp.le.s32.totalorder 1, %s25
      %p465 = scmp.lt.s32.totalorder %s25, 3
      %p466 = pnand %p464, %p465
      %p467 = pneg %p466
      // Predicated region
      $region81: #{_lambda_.3} parent=5 // pred_check
        _
      $region82: #{_lambda_.3} parent=5 // pred_check_branch
        %469 = sbr.rel (%p466) target = $region84
      $region83: #{_lambda_.3} parent=5 // pred_region
        %s470 = ssub.s32 %s25, 1
        %p471 = scmp.lt.s32.totalorder %s30, 1
        %s472 = scalar_select %p471, %s30, 1
        %s473 = smul.addr %s472, 2
        %s474 = smul.addr %s473, 8
        %s475 = scalar_lea.vmem %s0, %s474
        %p476 = pneg %p51
        %p477 = pneg %p48
        %p478 = pneg %p72
        %p479 = pneg %p69
        %p480 = pneg %p93
        %p481 = pneg %p90
        %p482 = pneg %p114
        %p483 = pneg %p111
        %p484 = pneg %p135
        %p485 = pneg %p132
        %p486 = pneg %p156
        %p487 = pneg %p153
        %p488 = pneg %p177
        %p489 = pneg %p174
        %p490 = pneg %p198
        %p491 = pneg %p195
        %p492 = pneg %p219
        %p493 = pneg %p216
        %p494 = pneg %p240
        %p495 = pneg %p237
        %p496 = pneg %p261
        %p497 = pneg %p258
        %p498 = pneg %p282
        %p499 = pneg %p279
        %p500 = pneg %p303
        %p501 = pneg %p300
        %p502 = pneg %p324
        %p503 = pneg %p321
        %p504 = pneg %p345
        %p505 = pneg %p342
        %p506 = pneg %p366
        %p507 = pneg %p363
        %p508 = pneg %p392
        %p509 = pneg %p389
        %s510 = sand.u32 %s379, 1
        %s511 = scalar_lea.sflag [#allocation3], %s510
        %s512 = sand.u32 %s379, 1
        %s513 = smul.addr %s512, 16
        %s514 = scalar_lea.vmem [#allocation2], %s513
        %p515 = scmp.lt.s32.totalorder %s30, 1
        %s516 = scalar_select %p515, %s30, 1
        %s517 = smul.addr %s516, 2
        %s518 = smul.addr %s517, 8
        %s519 = scalar_lea.vmem %s0, %s518
        %v520 = vld [vmem:[%s519] sm:$0xff]
        %v521 = vld [vmem:[%s519 + $0x8] sm:$0xff]
        %v522 = vld [vmem:[%s2] sm:$0xff]
        %v523 = vld [vmem:[%s2 + $0x8] sm:$0xff]
        %v524 = vld [vmem:[%s2 + $0x10] sm:$0xff]
        %v525 = vld [vmem:[%s2 + $0x18] sm:$0xff]
        %v526 = vld [vmem:[%s3] sm:$0x1]
        %v528 = vperm.slane %v526, 0
        %vm530 = vcmask 261120
        %v532 = vsel %vm530, %v520, 0
        %v535 = vsel %vm530, %v521, 0
        %537 = vmatpush.msra.mxu0 0.0
        %538 = vmatpush.msra.mxu0 0.0
        %539 = vmatpush.msra.mxu0 0.0
        %540 = vmatpush.msra.mxu0 0.0
        %541 = vmatpush.msra.mxu0 0.0
        %542 = vmatpush.msra.mxu0 0.0
        %543 = vmatpush.msra.mxu0 0.0
        %544 = vmatpush.msra.mxu0 0.0
        %545 = vmatpush.msra.mxu0 0.0
        %546 = vmatpush.msra.mxu0 0.0
        %547 = vmatpush.msra.mxu0 0.0
        %548 = vmatpush.msra.mxu0 0.0
        %549 = vmatpush.msra.mxu0 %v525
        %550 = vmatpush.msra.mxu0 %v524
        %551 = vmatpush.msra.mxu0 %v523
        %552 = vmatpush.msra.mxu0 %v522
        %553 = vmatmul.f32.gmra.mxu0 %v532
        %v554 = vpop.f32.mrf.mxu0
        %v555 = vadd.f32 %v528, %v554
        %556 = vmatmul.f32.gmra.mxu0 %v535
        %v557 = vpop.f32.mrf.mxu0
        %v558 = vadd.f32 %v528, %v557
        %559 = vdwg.mxu0
        %v560 = vlaneseq
        %v561 = vshrl.u32 %v560, 7
        %v562 = vadd.s32 %v561, 8
        %v563 = vlaneseq
        %v564 = vand.u32 %v563, 127
        %vm565 = vcmp.le.s32.totalorder %v564, %v561
        %vm566 = vcmp.le.s32.totalorder %v564, %v562
        %569 = vrot.lane.b32.xlu0 %v555, 96
        %v570 = vpop.permute.xlu0 %569
        %571 = vrot.lane.b32.xlu0 %v558, 96
        %v572 = vpop.permute.xlu0 %571
        %vm573 = vcmask 130048
        %v574 = vsel %vm573, %v555, 0
        %v576 = vsel %vm573, %v558, 0
        %v578 = vsel %vm573, %v570, 0
        %v580 = vsel %vm573, %v572, 0
        %582 = vmatpush.xpose.msra.mxu0 0.0
        %583 = vmatpush.xpose.msra.mxu0 0.0
        %584 = vmatpush.xpose.msra.mxu0 0.0
        %585 = vmatpush.xpose.msra.mxu0 0.0
        %586 = vmatpush.xpose.msra.mxu0 0.0
        %587 = vmatpush.xpose.msra.mxu0 0.0
        %588 = vmatpush.xpose.msra.mxu0 0.0
        %589 = vmatpush.xpose.msra.mxu0 0.0
        %590 = vmatpush.xpose.msra.mxu0 0.0
        %591 = vmatpush.xpose.msra.mxu0 0.0
        %592 = vmatpush.xpose.msra.mxu0 0.0
        %593 = vmatpush.xpose.msra.mxu0 0.0
        %594 = vmatpush.xpose.msra.mxu0 0.0
        %595 = vmatpush.xpose.msra.mxu0 0.0
        %596 = vmatpush.xpose.msra.mxu0 %v580
        %597 = vmatpush.xpose.msra.mxu0 %v578
        %598 = vmatmul.f32.gmra.mxu0 %v574
        %v599 = vpop.f32.mrf.mxu0
        %v600 = vadd.f32 0.0, %v599
        %601 = vmatmul.f32.gmra.mxu0 %v576
        %v602 = vpop.f32.mrf.mxu0
        %v603 = vadd.f32 0.0, %v602
        %604 = vdwg.mxu0
        %v605 = vmul.f32 %v600, 0.25
        %v606 = vmul.f32 %v603, 0.25
        %v607 = vsel %vm565, %v605, -1e+30
        %v608 = vsel %vm566, %v606, -1e+30
        %v609 = vsel %vm573, %v607, -inf
        %610 = vmax.xlane.f32.xlu0 %v609
        %v611 = vpop.xlane.xlu0 %610
        %v612 = vsel %vm573, %v608, -inf
        %613 = vmax.xlane.f32.xlu0 %v612
        %v614 = vpop.xlane.xlu0 %613
        %v615 = vsub.f32 %v607, %v611
        %v616 = vsub.f32 %v608, %v614
        %v617 = vmul.f32 %v615, 1.442695
        %v618 = vpow.pop %v617
        %v619 = vmul.f32 %v616, 1.442695
        %v620 = vpow.pop %v619
        %v621 = vsel %vm573, %v618, 0.0
        %622 = vadd.xlane.f32.xlu0 %v621
        %v623 = vpop.xlane.xlu0 %622
        %v624 = vsel %vm573, %v620, 0.0
        %625 = vadd.xlane.f32.xlu0 %v624
        %v626 = vpop.xlane.xlu0 %625
        %627 = vrot.lane.b32.xlu0 %v555, 64
        %v628 = vpop.permute.xlu0 %627
        %629 = vrot.lane.b32.xlu0 %v558, 64
        %v630 = vpop.permute.xlu0 %629
        %v634 = vsel %vm573, %v618, 0
        %v637 = vsel %vm573, %v620, 0
        %639 = vmatpush.msra.mxu0 0.0
        %640 = vmatpush.msra.mxu0 0.0
        %641 = vmatpush.msra.mxu0 0.0
        %642 = vmatpush.msra.mxu0 0.0
        %643 = vmatpush.msra.mxu0 0.0
        %644 = vmatpush.msra.mxu0 0.0
        %645 = vmatpush.msra.mxu0 0.0
        %646 = vmatpush.msra.mxu0 0.0
        %647 = vmatpush.msra.mxu0 0.0
        %648 = vmatpush.msra.mxu0 0.0
        %649 = vmatpush.msra.mxu0 0.0
        %650 = vmatpush.msra.mxu0 0.0
        %651 = vmatpush.msra.mxu0 0.0
        %652 = vmatpush.msra.mxu0 0.0
        %653 = vmatpush.msra.mxu0 %v630
        %654 = vmatpush.msra.mxu0 %v628
        %655 = vmatmul.f32.gmra.mxu0 %v634
        %v656 = vpop.f32.mrf.mxu0
        %v657 = vadd.f32 0.0, %v656
        %658 = vmatmul.f32.gmra.mxu0 %v637
        %v659 = vpop.f32.mrf.mxu0
        %v660 = vadd.f32 0.0, %v659
        %661 = vdwg.mxu0
        %v662 = vrcp.pop %v623
        %v663 = vrcp.pop %v626
        %v664 = vmul.f32 %v657, %v662
        %v665 = vmul.f32 %v660, %v663
        %666 = vrot.lane.b32.xlu0 %v555, 112
        %v667 = vpop.permute.xlu0 %666
        %668 = vrot.lane.b32.xlu0 %v558, 112
        %v669 = vpop.permute.xlu0 %668
        %670 = vrot.lane.b32.xlu0 %v555, 80
        %v671 = vpop.permute.xlu0 %670
        %672 = vrot.lane.b32.xlu0 %v558, 80
        %v673 = vpop.permute.xlu0 %672
        %v674 = vsel %vm573, %v667, 0
        %v676 = vsel %vm573, %v669, 0
        %v678 = vsel %vm573, %v671, 0
        %v680 = vsel %vm573, %v673, 0
        %682 = vmatpush.xpose.msra.mxu0 0.0
        %683 = vmatpush.xpose.msra.mxu0 0.0
        %684 = vmatpush.xpose.msra.mxu0 0.0
        %685 = vmatpush.xpose.msra.mxu0 0.0
        %686 = vmatpush.xpose.msra.mxu0 0.0
        %687 = vmatpush.xpose.msra.mxu0 0.0
        %688 = vmatpush.xpose.msra.mxu0 0.0
        %689 = vmatpush.xpose.msra.mxu0 0.0
        %690 = vmatpush.xpose.msra.mxu0 0.0
        %691 = vmatpush.xpose.msra.mxu0 0.0
        %692 = vmatpush.xpose.msra.mxu0 0.0
        %693 = vmatpush.xpose.msra.mxu0 0.0
        %694 = vmatpush.xpose.msra.mxu0 0.0
        %695 = vmatpush.xpose.msra.mxu0 0.0
        %696 = vmatpush.xpose.msra.mxu0 %v680
        %697 = vmatpush.xpose.msra.mxu0 %v678
        %698 = vmatmul.f32.gmra.mxu0 %v674
        %v699 = vpop.f32.mrf.mxu0
        %v700 = vadd.f32 0.0, %v699
        %701 = vmatmul.f32.gmra.mxu0 %v676
        %v702 = vpop.f32.mrf.mxu0
        %v703 = vadd.f32 0.0, %v702
        %704 = vdwg.mxu0
        %v705 = vmul.f32 %v700, 0.25
        %v706 = vmul.f32 %v703, 0.25
        %v707 = vsel %vm565, %v705, -1e+30
        %v708 = vsel %vm566, %v706, -1e+30
        %v709 = vsel %vm573, %v707, -inf
        %710 = vmax.xlane.f32.xlu0 %v709
        %v711 = vpop.xlane.xlu0 %710
        %v712 = vsel %vm573, %v708, -inf
        %713 = vmax.xlane.f32.xlu0 %v712
        %v714 = vpop.xlane.xlu0 %713
        %v715 = vsub.f32 %v707, %v711
        %v716 = vsub.f32 %v708, %v714
        %v717 = vmul.f32 %v715, 1.442695
        %v718 = vpow.pop %v717
        %v719 = vmul.f32 %v716, 1.442695
        %v720 = vpow.pop %v719
        %v721 = vsel %vm573, %v718, 0.0
        %722 = vadd.xlane.f32.xlu0 %v721
        %v723 = vpop.xlane.xlu0 %722
        %v724 = vsel %vm573, %v720, 0.0
        %725 = vadd.xlane.f32.xlu0 %v724
        %v726 = vpop.xlane.xlu0 %725
        %727 = vrot.lane.b32.xlu0 %v555, 48
        %v728 = vpop.permute.xlu0 %727
        %729 = vrot.lane.b32.xlu0 %v558, 48
        %v730 = vpop.permute.xlu0 %729
        %v734 = vsel %vm573, %v718, 0
        %v737 = vsel %vm573, %v720, 0
        %739 = vmatpush.msra.mxu0 0.0
        %740 = vmatpush.msra.mxu0 0.0
        %741 = vmatpush.msra.mxu0 0.0
        %742 = vmatpush.msra.mxu0 0.0
        %743 = vmatpush.msra.mxu0 0.0
        %744 = vmatpush.msra.mxu0 0.0
        %745 = vmatpush.msra.mxu0 0.0
        %746 = vmatpush.msra.mxu0 0.0
        %747 = vmatpush.msra.mxu0 0.0
        %748 = vmatpush.msra.mxu0 0.0
        %749 = vmatpush.msra.mxu0 0.0
        %750 = vmatpush.msra.mxu0 0.0
        %751 = vmatpush.msra.mxu0 0.0
        %752 = vmatpush.msra.mxu0 0.0
        %753 = vmatpush.msra.mxu0 %v730
        %754 = vmatpush.msra.mxu0 %v728
        %755 = vmatmul.f32.gmra.mxu0 %v734
        %v756 = vpop.f32.mrf.mxu0
        %v757 = vadd.f32 0.0, %v756
        %758 = vmatmul.f32.gmra.mxu0 %v737
        %v759 = vpop.f32.mrf.mxu0
        %v760 = vadd.f32 0.0, %v759
        %761 = vdwg.mxu0
        %v762 = vrcp.pop %v723
        %v763 = vrcp.pop %v726
        %v764 = vmul.f32 %v757, %v762
        %v765 = vmul.f32 %v760, %v763
        %768 = vrot.lane.b32.xlu0 %v764, 16
        %v769 = vpop.permute.xlu0 %768
        %770 = vrot.lane.b32.xlu0 %v765, 16
        %v771 = vpop.permute.xlu0 %770
        %v774 = vsel %vm573, %v664, %v769
        %v775 = vsel %vm573, %v665, %v771
        %v776 = vld [vmem:[%s4] sm:$0xff]
        %v777 = vld [vmem:[%s4 + $0x8] sm:$0xff]
        %v778 = vld [vmem:[%s4 + $0x10] sm:$0xff]
        %v779 = vld [vmem:[%s4 + $0x18] sm:$0xff]
        %v780 = vld [vmem:[%s5] sm:$0x1]
        %v782 = vperm.slane %v780, 0
        %v785 = vsel %vm530, %v774, 0
        %v788 = vsel %vm530, %v775, 0
        %790 = vmatpush.msra.mxu0 0.0
        %791 = vmatpush.msra.mxu0 0.0
        %792 = vmatpush.msra.mxu0 0.0
        %793 = vmatpush.msra.mxu0 0.0
        %794 = vmatpush.msra.mxu0 0.0
        %795 = vmatpush.msra.mxu0 0.0
        %796 = vmatpush.msra.mxu0 0.0
        %797 = vmatpush.msra.mxu0 0.0
        %798 = vmatpush.msra.mxu0 0.0
        %799 = vmatpush.msra.mxu0 0.0
        %800 = vmatpush.msra.mxu0 0.0
        %801 = vmatpush.msra.mxu0 0.0
        %802 = vmatpush.msra.mxu0 %v779
        %803 = vmatpush.msra.mxu0 %v778
        %804 = vmatpush.msra.mxu0 %v777
        %805 = vmatpush.msra.mxu0 %v776
        %806 = vmatmul.f32.gmra.mxu0 %v785
        %v807 = vpop.f32.mrf.mxu0
        %v808 = vadd.f32 %v782, %v807
        %809 = vmatmul.f32.gmra.mxu0 %v788
        %v810 = vpop.f32.mrf.mxu0
        %v811 = vadd.f32 %v782, %v810
        %812 = vdwg.mxu0
        %v813 = vadd.f32 %v520, %v808
        %v814 = vadd.f32 %v521, %v811
        %v815 = vsel %vm530, %v813, 0.0
        %816 = vadd.xlane.f32.xlu0 %v815
        %v817 = vpop.xlane.xlu0 %816
        %v818 = vsel %vm530, %v814, 0.0
        %819 = vadd.xlane.f32.xlu0 %v818
        %v820 = vpop.xlane.xlu0 %819
        %v821 = vrcp.pop 32.0
        %v822 = vmul.f32 32.0, %v821
        %v823 = vsub.f32 1.0, %v822
        %v824 = vmul.f32 %v821, %v823
        %v825 = vadd.f32 %v821, %v824
        %vm826 = vweird.f32 %v821
        %v827 = vsel %vm826, %v821, %v825
        %v828 = vmul.f32 %v817, %v827
        %v829 = vmul.f32 %v820, %v827
        %v830 = vsub.f32 %v813, %v828
        %v831 = vsub.f32 %v814, %v829
        %v832 = vmul.f32 %v830, %v830
        %v833 = vmul.f32 %v831, %v831
        %v834 = vsel %vm530, %v832, 0.0
        %835 = vadd.xlane.f32.xlu0 %v834
        %v836 = vpop.xlane.xlu0 %835
        %v837 = vsel %vm530, %v833, 0.0
        %838 = vadd.xlane.f32.xlu0 %v837
        %v839 = vpop.xlane.xlu0 %838
        %v840 = vmul.f32 %v836, %v827
        %v841 = vmul.f32 %v839, %v827
        %v842 = vadd.f32 %v840, 1e-05
        %v843 = vadd.f32 %v841, 1e-05
        %v844 = vrsqrt.pop %v842
        %v845 = vmul.f32 %v844, %v842
        %v846 = vmul.f32 %v845, %v844
        %v847 = vmul.f32 0.5, %v846
        %v848 = vsub.f32 1.5, %v847
        %v849 = vmul.f32 %v844, %v848
        %vm850 = vweird.f32 %v842
        %vm851 = vweird.f32 %v844
        %vm852 = vmor %vm850, %vm851
        %v853 = vsel %vm852, %v844, %v849
        %v854 = vrsqrt.pop %v843
        %v855 = vmul.f32 %v854, %v843
        %v856 = vmul.f32 %v855, %v854
        %v857 = vmul.f32 0.5, %v856
        %v858 = vsub.f32 1.5, %v857
        %v859 = vmul.f32 %v854, %v858
        %vm860 = vweird.f32 %v843
        %vm861 = vweird.f32 %v854
        %vm862 = vmor %vm860, %vm861
        %v863 = vsel %vm862, %v854, %v859
        %v864 = vmul.f32 %v830, %v853
        %v865 = vmul.f32 %v831, %v863
        %v866 = vld [vmem:[%s6] sm:$0x1]
        %v868 = vperm.slane %v866, 0
        %v870 = vmul.f32 %v864, %v868
        %v871 = vmul.f32 %v865, %v868
        %v872 = vld [vmem:[%s7] sm:$0x1]
        %v874 = vperm.slane %v872, 0
        %v876 = vadd.f32 %v870, %v874
        %v877 = vadd.f32 %v871, %v874
        %v878 = vld [vmem:[%s8] sm:$0xff]
        %v879 = vld [vmem:[%s8 + $0x8] sm:$0xff]
        %v880 = vld [vmem:[%s8 + $0x10] sm:$0xff]
        %v881 = vld [vmem:[%s8 + $0x18] sm:$0xff]
        %v882 = vld [vmem:[%s9] sm:$0x1]
        %v884 = vperm.slane %v882, 0
        %v887 = vsel %vm530, %v876, 0
        %v890 = vsel %vm530, %v877, 0
        %892 = vmatpush.msra.mxu0 0.0
        %893 = vmatpush.msra.mxu0 0.0
        %894 = vmatpush.msra.mxu0 0.0
        %895 = vmatpush.msra.mxu0 0.0
        %896 = vmatpush.msra.mxu0 0.0
        %897 = vmatpush.msra.mxu0 0.0
        %898 = vmatpush.msra.mxu0 0.0
        %899 = vmatpush.msra.mxu0 0.0
        %900 = vmatpush.msra.mxu0 0.0
        %901 = vmatpush.msra.mxu0 0.0
        %902 = vmatpush.msra.mxu0 0.0
        %903 = vmatpush.msra.mxu0 0.0
        %904 = vmatpush.msra.mxu0 %v881
        %905 = vmatpush.msra.mxu0 %v880
        %906 = vmatpush.msra.mxu0 %v879
        %907 = vmatpush.msra.mxu0 %v878
        %908 = vmatmul.f32.gmra.mxu0 %v887
        %v909 = vpop.f32.mrf.mxu0
        %v910 = vadd.f32 %v884, %v909
        %911 = vmatmul.f32.gmra.mxu0 %v890
        %v912 = vpop.f32.mrf.mxu0
        %v913 = vadd.f32 %v884, %v912
        %914 = vdwg.mxu0
        %v915 = vmax.f32 %v910, 0.0
        %v916 = vmax.f32 %v913, 0.0
        %v917 = vld [vmem:[%s10] sm:$0xff]
        %v918 = vld [vmem:[%s10 + $0x8] sm:$0xff]
        %v919 = vld [vmem:[%s10 + $0x10] sm:$0xff]
        %v920 = vld [vmem:[%s10 + $0x18] sm:$0xff]
        %v921 = vld [vmem:[%s10 + $0x20] sm:$0xff]
        %v922 = vld [vmem:[%s10 + $0x28] sm:$0xff]
        %v923 = vld [vmem:[%s10 + $0x30] sm:$0xff]
        %v924 = vld [vmem:[%s10 + $0x38] sm:$0xff]
        %v925 = vld [vmem:[%s11] sm:$0x1]
        %v927 = vperm.slane %v925, 0
        %vm929 = vcmask 523264
        %v931 = vsel %vm929, %v915, 0
        %v934 = vsel %vm929, %v916, 0
        %936 = vmatpush.msra.mxu0 0.0
        %937 = vmatpush.msra.mxu0 0.0
        %938 = vmatpush.msra.mxu0 0.0
        %939 = vmatpush.msra.mxu0 0.0
        %940 = vmatpush.msra.mxu0 0.0
        %941 = vmatpush.msra.mxu0 0.0
        %942 = vmatpush.msra.mxu0 0.0
        %943 = vmatpush.msra.mxu0 0.0
        %944 = vmatpush.msra.mxu0 %v924
        %945 = vmatpush.msra.mxu0 %v923
        %946 = vmatpush.msra.mxu0 %v922
        %947 = vmatpush.msra.mxu0 %v921
        %948 = vmatpush.msra.mxu0 %v920
        %949 = vmatpush.msra.mxu0 %v919
        %950 = vmatpush.msra.mxu0 %v918
        %951 = vmatpush.msra.mxu0 %v917
        %952 = vmatmul.f32.gmra.mxu0 %v931
        %v953 = vpop.f32.mrf.mxu0
        %v954 = vadd.f32 %v927, %v953
        %955 = vmatmul.f32.gmra.mxu0 %v934
        %v956 = vpop.f32.mrf.mxu0
        %v957 = vadd.f32 %v927, %v956
        %958 = vdwg.mxu0
        %v959 = vadd.f32 %v876, %v954
        %v960 = vadd.f32 %v877, %v957
        %v961 = vsel %vm530, %v959, 0.0
        %962 = vadd.xlane.f32.xlu0 %v961
        %v963 = vpop.xlane.xlu0 %962
        %v964 = vsel %vm530, %v960, 0.0
        %965 = vadd.xlane.f32.xlu0 %v964
        %v966 = vpop.xlane.xlu0 %965
        %v967 = vmul.f32 %v963, %v827
        %v968 = vmul.f32 %v966, %v827
        %v969 = vsub.f32 %v959, %v967
        %v970 = vsub.f32 %v960, %v968
        %v971 = vmul.f32 %v969, %v969
        %v972 = vmul.f32 %v970, %v970
        %v973 = vsel %vm530, %v971, 0.0
        %974 = vadd.xlane.f32.xlu0 %v973
        %v975 = vpop.xlane.xlu0 %974
        %v976 = vsel %vm530, %v972, 0.0
        %977 = vadd.xlane.f32.xlu0 %v976
        %v978 = vpop.xlane.xlu0 %977
        %v979 = vmul.f32 %v975, %v827
        %v980 = vmul.f32 %v978, %v827
        %v981 = vadd.f32 %v979, 1e-05
        %v982 = vadd.f32 %v980, 1e-05
        %v983 = vrsqrt.pop %v981
        %v984 = vmul.f32 %v983, %v981
        %v985 = vmul.f32 %v984, %v983
        %v986 = vmul.f32 0.5, %v985
        %v987 = vsub.f32 1.5, %v986
        %v988 = vmul.f32 %v983, %v987
        %vm989 = vweird.f32 %v981
        %vm990 = vweird.f32 %v983
        %vm991 = vmor %vm989, %vm990
        %v992 = vsel %vm991, %v983, %v988
        %v993 = vrsqrt.pop %v982
        %v994 = vmul.f32 %v993, %v982
        %v995 = vmul.f32 %v994, %v993
        %v996 = vmul.f32 0.5, %v995
        %v997 = vsub.f32 1.5, %v996
        %v998 = vmul.f32 %v993, %v997
        %vm999 = vweird.f32 %v982
        %vm1000 = vweird.f32 %v993
        %vm1001 = vmor %vm999, %vm1000
        %v1002 = vsel %vm1001, %v993, %v998
        %v1003 = vmul.f32 %v969, %v992
        %v1004 = vmul.f32 %v970, %v1002
        %v1005 = vld [vmem:[%s12] sm:$0x1]
        %v1007 = vperm.slane %v1005, 0
        %v1009 = vmul.f32 %v1003, %v1007
        %v1010 = vmul.f32 %v1004, %v1007
        %v1011 = vld [vmem:[%s13] sm:$0x1]
        %v1013 = vperm.slane %v1011, 0
        %v1015 = vadd.f32 %v1009, %v1013
        %v1016 = vadd.f32 %v1010, %v1013
        %v1017 = vsel %vm530, %v1015, 0.0
        %1018 = vadd.xlane.f32.xlu0 %v1017
        %v1019 = vpop.xlane.xlu0 %1018
        %v1020 = vsel %vm530, %v1016, 0.0
        %1021 = vadd.xlane.f32.xlu0 %v1020
        %v1022 = vpop.xlane.xlu0 %1021
        %v1023 = vmul.f32 %v1019, %v827
        %v1024 = vmul.f32 %v1022, %v827
        %v1025 = vsub.f32 %v1015, %v1023
        %v1026 = vsub.f32 %v1016, %v1024
        %v1027 = vmul.f32 %v1025, %v1025
        %v1028 = vmul.f32 %v1026, %v1026
        %v1029 = vsel %vm530, %v1027, 0.0
        %1030 = vadd.xlane.f32.xlu0 %v1029
        %v1031 = vpop.xlane.xlu0 %1030
        %v1032 = vsel %vm530, %v1028, 0.0
        %1033 = vadd.xlane.f32.xlu0 %v1032
        %v1034 = vpop.xlane.xlu0 %1033
        %v1035 = vmul.f32 %v1031, %v827
        %v1036 = vmul.f32 %v1034, %v827
        %v1037 = vadd.f32 %v1035, 1e-05
        %v1038 = vadd.f32 %v1036, 1e-05
        %v1039 = vrsqrt.pop %v1037
        %v1040 = vmul.f32 %v1039, %v1037
        %v1041 = vmul.f32 %v1040, %v1039
        %v1042 = vmul.f32 0.5, %v1041
        %v1043 = vsub.f32 1.5, %v1042
        %v1044 = vmul.f32 %v1039, %v1043
        %vm1045 = vweird.f32 %v1037
        %vm1046 = vweird.f32 %v1039
        %vm1047 = vmor %vm1045, %vm1046
        %v1048 = vsel %vm1047, %v1039, %v1044
        %v1049 = vrsqrt.pop %v1038
        %v1050 = vmul.f32 %v1049, %v1038
        %v1051 = vmul.f32 %v1050, %v1049
        %v1052 = vmul.f32 0.5, %v1051
        %v1053 = vsub.f32 1.5, %v1052
        %v1054 = vmul.f32 %v1049, %v1053
        %vm1055 = vweird.f32 %v1038
        %vm1056 = vweird.f32 %v1049
        %vm1057 = vmor %vm1055, %vm1056
        %v1058 = vsel %vm1057, %v1049, %v1054
        %v1059 = vmul.f32 %v1025, %v1048
        %v1060 = vmul.f32 %v1026, %v1058
        %v1061 = vld [vmem:[%s14] sm:$0x1]
        %v1063 = vperm.slane %v1061, 0
        %v1065 = vmul.f32 %v1059, %v1063
        %v1066 = vmul.f32 %v1060, %v1063
        %v1067 = vld [vmem:[%s15] sm:$0x1]
        %v1069 = vperm.slane %v1067, 0
        %v1071 = vadd.f32 %v1065, %v1069
        %v1072 = vadd.f32 %v1066, %v1069
        %1073 = vst.msk [vmem:[%s514] sm:$0xff] %vm530, %v1071
        %1074 = vst.msk [vmem:[%s514 + $0x8] sm:$0xff] %vm530, %v1072
        %s1075 = sand.u32 %s379, 1
        %s1076 = scalar_lea.sflag [#allocation3], %s1075
        %s1077 = sand.u32 %s379, 1
        %s1078 = smul.addr %s1077, 16
        %s1079 = scalar_lea.vmem [#allocation2], %s1078
        // Predicated region
        $region85: #{_lambda_.3} parent=83 // pred_check
          %p1080 = pneg %p389
        $region86: #{_lambda_.3} parent=83 // pred_check_branch
          %1082 = sbr.rel (%p1080) target = $region88
        $region87: #{_lambda_.3} parent=83 // pred_region
          %1084 = vsyncadd %s1076, 0
          %s1085 = smul.addr %s30, 2
          %s1086 = smul.addr %s1085, 8
          %s1087 = scalar_lea.hbm %s16, %s1086
          %s1088 = sshll.u32 %s1079, 4
          %s1089 = int_to_ptr.vmem [resolvable:$true] %s1088
          %s1090 = sshll.u32 %s1087, 4
          %s1091 = int_to_ptr.hbm [resolvable:$true] %s1090
          %1096 = dma.vmem_to_hbm [thread:$0]  %s1089, 256, %s1091, %s1076, 128, 128, 8
        $region88: #{_lambda_.3} parent=83 // pred_fallthru
          _
      $region84: #{_lambda_.3} parent=5 // pred_fallthru
        _
      %p1097 = scmp.le.s32.totalorder 2, %s25
      // Predicated region
      $region89: #{_lambda_.3} parent=5 // pred_check
        %p1098 = pneg %p1097
      $region90: #{_lambda_.3} parent=5 // pred_check_branch
        %1100 = sbr.rel (%p1098) target = $region92
      $region91: #{_lambda_.3} parent=5 // pred_region
        %s1101 = ssub.s32 %s25, 2
        // Predicated region
        $region93: #{_lambda_.3} parent=91 // pred_check
          %p1102 = pneg %p395
        $region94: #{_lambda_.3} parent=91 // pred_check_branch
          %1104 = sbr.rel (%p1102) target = $region96
        $region95: #{_lambda_.3} parent=91 // pred_region
          %s1105 = sand.u32 %s380, 1
          %s1106 = scalar_lea.sflag [#allocation3], %s1105
          %s1107 = sand.u32 %s380, 1
          %s1108 = smul.addr %s1107, 16
          %s1109 = scalar_lea.vmem [#allocation2], %s1108
          %1111 = dma.done %s1106, 256
        $region96: #{_lambda_.3} parent=91 // pred_fallthru
          _
      $region92: #{_lambda_.3} parent=5 // pred_fallthru
        _
    $region6: #{_lambda_.3} parent=1 // loop_footer
      %s29 = sadd.s32 1, %s25
    $region7: #{_lambda_.3} parent=1 // loop_footer_branch
      %24 = sbr.rel target = $region3
    $region8: #{_lambda_.3} parent=1 // loop_exit
      _
    %1112 = vsyncpa [#allocation3], 1
    %s1113 = scalar_lea.sflag [#allocation3], 1
    %1114 = vsyncpa %s1113, 1

</llo_original>
